<compile_context>
chip_gen: v7x
topology: tpu7x:2x2x1
jax: 0.10.0
libtpu: 0.0.40
codegen_flags: <defaults>
</compile_context>

<pallas_src>
import jax
import jax.numpy as jnp
from jax.experimental import pallas as pl
from jax.experimental.pallas import tpu as pltpu


def _contrastive_kernel(temp_ref, idxc_ref, idxr_ref, img_ref, txt_ref,
                        wv_ref, bv_ref, wt_ref, bt_ref,
                        cmax_ref, csum_ref, carg_ref, rlse_ref, cross_ref, i2t_ref,
                        txtn_scr, colid_scr, rowid_scr):
    c = pl.program_id(0)             # core-split index ("parallel")
    j = pl.program_id(1)             # row-tile index within the split ("arbitrary")
    nj = pl.num_programs(1)
    f, tm, _ = img_ref.shape
    _, n = txtn_scr.shape

    @pl.when(j == 0)
    def _init():
        # clip_contrastive_temperature(); 1/t folded once into the resident text feats.
        inv_t = 1.0 / jnp.clip(temp_ref[0, 0], 0.001, 0.5)

        # text_proj + F.normalize(dim=-1), produced directly in transposed (E, N)
        # layout:  (x @ W^T)^T = W @ x^T  -> the per-tile sim matmul below is a
        # plain (1,0)-contraction, no per-tile transpose / transposed-feed mode.
        txt_pT = jnp.dot(wt_ref[...], txt_ref[...],
                         preferred_element_type=jnp.float32) + bt_ref[...]
        inv_norm = jax.lax.rsqrt(jnp.maximum(
            jnp.sum(txt_pT * txt_pT, axis=0, keepdims=True), 1e-24))
        txtn_scr[...] = (txt_pT * (inv_norm * inv_t)).astype(jnp.bfloat16)

        # loop-invariant iotas (hoisted out of the per-tile bundle budget)
        colid_scr[...] = jax.lax.broadcasted_iota(jnp.int32, (1, n), 1)
        rowid_scr[...] = jax.lax.broadcasted_iota(jnp.int32, (tm, 1), 0)

        # per-core accumulators live directly in the (resident) output blocks
        cmax_ref[0] = jnp.full((1, n), -jnp.inf, dtype=jnp.float32)
        csum_ref[0] = jnp.zeros((1, n), dtype=jnp.float32)
        carg_ref[0] = jnp.zeros((1, n), dtype=jnp.int32)
        rlse_ref[0] = jnp.zeros((1, 1), dtype=jnp.float32)
        cross_ref[0] = jnp.zeros((1, 1), dtype=jnp.float32)
        i2t_ref[0] = jnp.zeros((1, 1), dtype=jnp.float32)

    row0 = (c * nj + j) * tm

    # vision_proj + F.normalize per frame, then frame mean (no pooling matmul).
    acc = jnp.zeros((tm, wv_ref.shape[1]), jnp.float32)
    for k in range(f):                      # f is tiny -> static unroll
        pk = jnp.dot(img_ref[k], wv_ref[...],
                     preferred_element_type=jnp.float32) + bv_ref[...]
        pk_inv = jax.lax.rsqrt(jnp.maximum(
            jnp.sum(pk * pk, axis=-1, keepdims=True), 1e-24))
        acc = acc + pk * pk_inv
    img_pooled = (acc * (1.0 / f)).astype(jnp.bfloat16)          # (tm, E) bf16

    # similarity tile, already scaled by 1/t (folded into txtn): (tm, N) f32,
    # bf16 x bf16 operands on the MXU, f32 accumulation.
    sim = jnp.dot(img_pooled, txtn_scr[...], preferred_element_type=jnp.float32)

    # get_mask(idx, normalize=True); the targets matrix is symmetric so i2t/t2i
    # share the cross term sum(targets * sim).
    mask = (idxc_ref[...] == idxr_ref[...]).astype(jnp.float32)   # (tm, N)
    inv_cnt = pl.reciprocal(jnp.sum(mask, axis=1, keepdims=True), approx=True)

    # ---- i2t: row log-softmax loss + row argmax accuracy (single big exp) ----
    row_max = jnp.max(sim, axis=1, keepdims=True)                 # (tm, 1)
    p = jnp.exp(sim - row_max)                                    # (tm, N)
    row_lse = row_max + jnp.log(jnp.sum(p, axis=1, keepdims=True))
    rlse_ref[0] += jnp.sum(row_lse, axis=0, keepdims=True)
    cross_ref[0] += jnp.sum(jnp.sum(mask * sim, axis=1, keepdims=True) * inv_cnt,
                            axis=0, keepdims=True)

    i2t_pred = jnp.min(jnp.where(sim >= row_max, colid_scr[...], n),
                       axis=1, keepdims=True)                     # (tm, 1)
    diag = row0 + rowid_scr[...]
    i2t_ref[0] += jnp.sum((i2t_pred == diag).astype(jnp.float32),
                          axis=0, keepdims=True)

    # ---- t2i: online column logsumexp + online column argmax ----
    # exp(sim - new_cmax) = p * exp(row_max) * exp(-new_cmax)  (reuses p; exact
    # for |sim| <~ 80, i.e. temp >~ 0.012 -- the module's practical range).
    tile_cmax = jnp.max(sim, axis=0, keepdims=True)               # (1, N)
    old_cmax = cmax_ref[0]
    new_cmax = jnp.maximum(old_cmax, tile_cmax)
    colw = jnp.sum(p * jnp.exp(row_max), axis=0, keepdims=True)   # (1, N)
    csum_ref[0] = (csum_ref[0] * jnp.exp(old_cmax - new_cmax)
                   + colw * jnp.exp(-new_cmax))
    tile_carg = row0 + jnp.min(jnp.where(sim >= tile_cmax, rowid_scr[...], tm),
                               axis=0, keepdims=True)
    # strict ">" keeps the earlier row on ties -> torch/jnp first-argmax semantics
    carg_ref[0] = jnp.where(tile_cmax > old_cmax, tile_carg, carg_ref[0])
    cmax_ref[0] = new_cmax


def singularity_contrastive_forward(pooled_image_embeds, pooled_text_embeds, idx,
                                    params, itc_loss_weight=1.0, block_rows=None,
                                    num_core_splits=2):
    """Pallas implementation of the contrastive-loss part of
    SingularityRetrievalBase.forward (projection -> normalize -> sim -> ITC loss/acc)."""
    n, f, dv = pooled_image_embeds.shape
    dt = pooled_text_embeds.shape[-1]
    e = params["vision_proj_w"].shape[0]          # nn.Linear weight is (out, in)

    # tile heuristic: largest candidate <= 128 dividing n (v5e spill / v7x VMEM cap).
    if block_rows is None:
        block_rows = n
        for cand in (128, 64, 32, 16, 8):
            if n % cand == 0:
                block_rows = cand
                break
    tm = block_rows
    assert n % tm == 0, "batch must be divisible by block_rows"
    assert tm % 8 == 0 or tm == n, "block_rows must be a multiple of 8"
    # TODO(synk): pad n to a multiple of 8*num_core_splits and mask the pad rows/cols
    #             instead of the single-tile fallback for awkward batch sizes.

    num_tiles = n // tm
    nc = num_core_splits if (num_tiles % num_core_splits == 0
                             and num_tiles >= num_core_splits) else 1
    tpc = num_tiles // nc

    # bf16 embeddings / weights (MXU-native, half the HBM->VMEM DMA bytes).
    img_fnd = jnp.transpose(pooled_image_embeds, (1, 0, 2)).astype(jnp.bfloat16)  # (F,N,Dv)
    txt_t = jnp.transpose(pooled_text_embeds).astype(jnp.bfloat16)                # (Dt,N)
    wv = jnp.transpose(params["vision_proj_w"]).astype(jnp.bfloat16)              # (Dv,E)
    bv = params["vision_proj_b"].reshape(1, e).astype(jnp.float32)
    wt = params["text_proj_w"].astype(jnp.bfloat16)                               # (E,Dt)
    bt = params["text_proj_b"].reshape(e, 1).astype(jnp.float32)
    temp = params["temp"].reshape(1, 1).astype(jnp.float32)
    idx_col = idx.reshape(n, 1).astype(jnp.int32)
    idx_row = idx.reshape(1, n).astype(jnp.int32)

    # scoped-VMEM budget from the actual resident footprint (+ headroom)
    resident = (dt * n * 2 + dv * e * 2 + e * dt * 2 + 2 * e * 4 + 2 * n * 4
                + e * n * 2                      # txtn scratch (bf16)
                + 2 * f * tm * dv * 2            # double-buffered image tile
                + 3 * n * 4 + 3 * 4              # per-core output slabs (in VMEM)
                + n * 4 + tm * 4)                # hoisted iotas
    vmem_limit = int(min(48 * 2 ** 20, max(32 * 2 ** 20, 2 * resident)))

    outs = pl.pallas_call(
        _contrastive_kernel,
        grid=(nc, tpc),
        in_specs=[
            pl.BlockSpec(memory_space=pltpu.MemorySpace.SMEM),            # temp (scalar)
            pl.BlockSpec((tm, 1), lambda c, j: (c * tpc + j, 0)),         # idx rows of tile
            pl.BlockSpec((1, n), lambda c, j: (0, 0)),                    # idx, lane layout
            pl.BlockSpec((f, tm, dv), lambda c, j: (0, c * tpc + j, 0)),  # image tile (pipelined)
            pl.BlockSpec((dt, n), lambda c, j: (0, 0)),                   # text^T (resident)
            pl.BlockSpec((dv, e), lambda c, j: (0, 0)),                   # W_v^T
            pl.BlockSpec((1, e), lambda c, j: (0, 0)),                    # b_v
            pl.BlockSpec((e, dt), lambda c, j: (0, 0)),                   # W_t
            pl.BlockSpec((e, 1), lambda c, j: (0, 0)),                    # b_t^T
        ],
        out_specs=(
            pl.BlockSpec((1, 1, n), lambda c, j: (c, 0, 0)),   # column max
            pl.BlockSpec((1, 1, n), lambda c, j: (c, 0, 0)),   # column sum-exp
            pl.BlockSpec((1, 1, n), lambda c, j: (c, 0, 0)),   # column argmax
            pl.BlockSpec((1, 1, 1), lambda c, j: (c, 0, 0)),   # sum of row LSE
            pl.BlockSpec((1, 1, 1), lambda c, j: (c, 0, 0)),   # cross term
            pl.BlockSpec((1, 1, 1), lambda c, j: (c, 0, 0)),   # i2t correct count
        ),
        out_shape=(
            jax.ShapeDtypeStruct((nc, 1, n), jnp.float32),
            jax.ShapeDtypeStruct((nc, 1, n), jnp.float32),
            jax.ShapeDtypeStruct((nc, 1, n), jnp.int32),
            jax.ShapeDtypeStruct((nc, 1, 1), jnp.float32),
            jax.ShapeDtypeStruct((nc, 1, 1), jnp.float32),
            jax.ShapeDtypeStruct((nc, 1, 1), jnp.float32),
        ),
        scratch_shapes=[
            pltpu.VMEM((e, n), jnp.bfloat16),   # normalized text^T * (1/t), bf16
            pltpu.VMEM((1, n), jnp.int32),      # hoisted column-id iota
            pltpu.VMEM((tm, 1), jnp.int32),     # hoisted local row-id iota
        ],
        compiler_params=pltpu.CompilerParams(
            dimension_semantics=("parallel", "arbitrary"),
            vmem_limit_bytes=vmem_limit),
    )(temp, idx_col, idx_row, img_fnd, txt_t, wv, bv, wt, bt)

    cmax, csum, carg, rlse, cross, i2t_cnt = outs

    # ---- tiny epilogue: merge the (<= num_core_splits) per-core partials ----
    cmax2 = cmax[:, 0, :]                                   # (nc, N)
    csum2 = csum[:, 0, :]
    carg2 = carg[:, 0, :]
    m = jnp.max(cmax2, axis=0)                              # (N,)
    s = jnp.sum(csum2 * jnp.exp(cmax2 - m[None, :]), axis=0)
    col_lse_sum = jnp.sum(m + jnp.log(s))
    best = jnp.argmax(cmax2, axis=0)                        # first core on ties -> smaller rows
    carg_final = jnp.take_along_axis(carg2, best[None, :], axis=0)[0]
    t2i_correct = jnp.sum((carg_final == jnp.arange(n)).astype(jnp.float32))

    rlse_sum = jnp.sum(rlse)
    cross_sum = jnp.sum(cross)
    i2t_correct = jnp.sum(i2t_cnt)

    inv_n = 1.0 / n
    # loss_i2t.mean = (sum_row_lse - cross)/N ; loss_t2i.mean = (sum_col_lse - cross)/N
    loss = 0.5 * inv_n * (rlse_sum + col_lse_sum - 2.0 * cross_sum)
    acc = 0.5 * inv_n * (i2t_correct + t2i_correct)
    return dict(loss_ita=loss * itc_loss_weight, accuracy_ita=acc)


def _reference(pooled_image_embeds, pooled_text_embeds, idx, params, itc_loss_weight):
    """Plain-JAX reference mirroring the PyTorch math (sim operands quantized to
    bf16 exactly like the kernel feeds the MXU)."""
    t = jnp.clip(params["temp"], 0.001, 0.5)
    img = pooled_image_embeds @ params["vision_proj_w"].T + params["vision_proj_b"]
    img = img / jnp.maximum(jnp.linalg.norm(img, axis=-1, keepdims=True), 1e-12)
    txt = pooled_text_embeds @ params["text_proj_w"].T + params["text_proj_b"]
    txt = txt / jnp.maximum(jnp.linalg.norm(txt, axis=-1, keepdims=True), 1e-12)
    # einsum('mld,nd->mln').mean(1)/t == (mean_l img) @ (txt/t).T
    img_pooled = img.mean(1).astype(jnp.bfloat16).astype(jnp.float32)
    txt_scaled = (txt / t).astype(jnp.bfloat16).astype(jnp.float32)
    sim_i2t = img_pooled @ txt_scaled.T
    sim_t2i = sim_i2t.T
    mask = (idx[:, None] == idx[None, :]).astype(jnp.float32)
    targets = mask / mask.sum(1, keepdims=True)
    li2t = -jnp.sum(jax.nn.log_softmax(sim_i2t, axis=1) * targets, axis=1).mean()
    lt2i = -jnp.sum(jax.nn.log_softmax(sim_t2i, axis=1) * targets, axis=1).mean()
    loss = 0.5 * (li2t + lt2i)
    m = sim_i2t.shape[0]
    acc_i2t = jnp.mean((jnp.argmax(sim_i2t, 1) == jnp.arange(m)).astype(jnp.float32))
    acc_t2i = jnp.mean((jnp.argmax(sim_t2i, 1) == jnp.arange(m)).astype(jnp.float32))
    return dict(loss_ita=loss * itc_loss_weight, accuracy_ita=0.5 * (acc_i2t + acc_t2i))


if __name__ == "__main__":
    # shapes implied by the forward:
    #   pooled_image_embeds (bsz, num_frms, vision_width), pooled_text_embeds (bsz, text_width)
    bsz, num_frms, vision_width, text_width, embed_dim = 32, 4, 128, 128, 128

    key = jax.random.PRNGKey(0)
    k_img, k_txt, k_wv, k_bv, k_wt, k_bt = jax.random.split(key, 6)

    def bf16_round(x):   # kernel feeds the MXU bf16; round the f32 data so both paths match
        return x.astype(jnp.bfloat16).astype(jnp.float32)

    pooled_image_embeds = bf16_round(
        jax.random.normal(k_img, (bsz, num_frms, vision_width), jnp.float32))
    pooled_text_embeds = bf16_round(
        jax.random.normal(k_txt, (bsz, text_width), jnp.float32))
    # duplicate ids exercise the normalized mask / targets path
    idx = jnp.asarray([i // 2 for i in range(bsz)], jnp.int32)

    params = dict(
        vision_proj_w=bf16_round(
            0.05 * jax.random.normal(k_wv, (embed_dim, vision_width), jnp.float32)),
        vision_proj_b=0.01 * jax.random.normal(k_bv, (embed_dim,), jnp.float32),
        text_proj_w=bf16_round(
            0.05 * jax.random.normal(k_wt, (embed_dim, text_width), jnp.float32)),
        text_proj_b=0.01 * jax.random.normal(k_bt, (embed_dim,), jnp.float32),
        temp=jnp.array(0.07, jnp.float32),
    )
    itc_loss_weight = 1.0

    out = singularity_contrastive_forward(pooled_image_embeds, pooled_text_embeds,
                                          idx, params, itc_loss_weight,
                                          block_rows=8)   # grid (2 splits, 2 tiles each)
    jax.block_until_ready(out)

    ref = _reference(pooled_image_embeds, pooled_text_embeds, idx, params, itc_loss_weight)
    assert jnp.allclose(out["loss_ita"], ref["loss_ita"], rtol=2e-3, atol=2e-3), \
        (out["loss_ita"], ref["loss_ita"])
    # bf16 sim operands can flip a near-tie argmax; allow at most ~one flipped row
    # per direction (perf-review noted slack).
    assert abs(float(out["accuracy_ita"]) - float(ref["accuracy_ita"])) <= 1.0 / bsz + 1e-6, \
        (out["accuracy_ita"], ref["accuracy_ita"])

    print("KERNEL_OK")
</pallas_src>

<mosaic_0001>
module attributes {stable_mosaic.version = 11 : i64} {
  func.func @_contrastive_kernel(%arg0: i32, %arg1: i32, %arg2: memref<1x1xf32, #tpu.memory_space<smem>>, %arg3: memref<8x1xi32, #tpu.memory_space<vmem>>, %arg4: memref<1x32xi32, #tpu.memory_space<vmem>>, %arg5: memref<4x8x128xbf16, #tpu.memory_space<vmem>>, %arg6: memref<128x32xbf16, #tpu.memory_space<vmem>>, %arg7: memref<128x128xbf16, #tpu.memory_space<vmem>>, %arg8: memref<1x128xf32, #tpu.memory_space<vmem>>, %arg9: memref<128x128xbf16, #tpu.memory_space<vmem>>, %arg10: memref<128x1xf32, #tpu.memory_space<vmem>>, %arg11: memref<1x1x32xf32, #tpu.memory_space<vmem>>, %arg12: memref<1x1x32xf32, #tpu.memory_space<vmem>>, %arg13: memref<1x1x32xi32, #tpu.memory_space<vmem>>, %arg14: memref<1x1x1xf32, #tpu.memory_space<vmem>>, %arg15: memref<1x1x1xf32, #tpu.memory_space<vmem>>, %arg16: memref<1x1x1xf32, #tpu.memory_space<vmem>>, %arg17: memref<128x32xbf16, #tpu.memory_space<vmem>>, %arg18: memref<1x32xi32, #tpu.memory_space<vmem>>, %arg19: memref<8x1xi32, #tpu.memory_space<vmem>>) attributes {dimension_semantics = [#tpu.dimension_semantics<parallel>, #tpu.dimension_semantics<arbitrary>], iteration_bounds = array<i64: 2, 2>, scalar_prefetch = 0 : i64, scratch_operands = 3 : i64, tpu.core_type = #tpu.core_type<tc>, window_params = [{transform_indices = @transform_0, window_bounds = array<i64: 1, 1>}, {transform_indices = @transform_1, window_bounds = array<i64: 8, 1>}, {pipeline_mode = #tpu.pipeline_mode<synchronous>, transform_indices = @transform_2, window_bounds = array<i64: 1, 32>}, {transform_indices = @transform_3, window_bounds = array<i64: 4, 8, 128>}, {pipeline_mode = #tpu.pipeline_mode<synchronous>, transform_indices = @transform_4, window_bounds = array<i64: 128, 32>}, {pipeline_mode = #tpu.pipeline_mode<synchronous>, transform_indices = @transform_5, window_bounds = array<i64: 128, 128>}, {pipeline_mode = #tpu.pipeline_mode<synchronous>, transform_indices = @transform_6, window_bounds = array<i64: 1, 128>}, {pipeline_mode = #tpu.pipeline_mode<synchronous>, transform_indices = @transform_7, window_bounds = array<i64: 128, 128>}, {pipeline_mode = #tpu.pipeline_mode<synchronous>, transform_indices = @transform_8, window_bounds = array<i64: 128, 1>}, {transform_indices = @transform_9, window_bounds = array<i64: 1, 1, 32>}, {transform_indices = @transform_10, window_bounds = array<i64: 1, 1, 32>}, {transform_indices = @transform_11, window_bounds = array<i64: 1, 1, 32>}, {transform_indices = @transform_12, window_bounds = array<i64: 1, 1, 1>}, {transform_indices = @transform_13, window_bounds = array<i64: 1, 1, 1>}, {transform_indices = @transform_14, window_bounds = array<i64: 1, 1, 1>}]} {
    %c0_i32 = arith.constant 0 : i32
    %0 = arith.cmpi eq, %arg1, %c0_i32 : i32
    %1 = arith.extui %0 : i1 to i32
    %c0_i32_0 = arith.constant 0 : i32
    %2 = arith.cmpi ne, %1, %c0_i32_0 : i32
    scf.if %2 {
      %c0_100 = arith.constant 0 : index
      %c0_101 = arith.constant 0 : index
      %182 = memref.load %arg2[%c0_100, %c0_101] : memref<1x1xf32, #tpu.memory_space<smem>>
      %cst_102 = arith.constant 1.000000e-03 : f32
      %cst_103 = arith.constant 5.000000e-01 : f32
      %183 = arith.maximumf %cst_102, %182 : f32
      %184 = arith.minimumf %cst_103, %183 : f32
      %cst_104 = arith.constant 1.000000e+00 : f32
      %185 = arith.divf %cst_104, %184 : f32
      %c0_105 = arith.constant 0 : index
      %c0_106 = arith.constant 0 : index
      %186 = vector.load %arg9[%c0_105, %c0_106] : memref<128x128xbf16, #tpu.memory_space<vmem>>, vector<128x128xbf16>
      %c0_107 = arith.constant 0 : index
      %c0_108 = arith.constant 0 : index
      %187 = vector.load %arg6[%c0_107, %c0_108] : memref<128x32xbf16, #tpu.memory_space<vmem>>, vector<128x32xbf16>
      %cst_109 = arith.constant dense<0.000000e+00> : vector<128x32xf32>
      %188 = tpu.matmul %186, %187, %cst_109 {dimension_numbers = #tpu.dot_dimension_numbers<[1], [0], [0], [1], [0, 0, 1, 1], [], []>} : vector<128x128xbf16>, vector<128x32xbf16>, vector<128x32xf32> -> vector<128x32xf32>
      %c0_110 = arith.constant 0 : index
      %c0_111 = arith.constant 0 : index
      %189 = vector.load %arg10[%c0_110, %c0_111] : memref<128x1xf32, #tpu.memory_space<vmem>>, vector<128x1xf32>
      %190 = vector.broadcast %189 : vector<128x1xf32> to vector<128x32xf32>
      %191 = arith.addf %188, %190 : vector<128x32xf32>
      %192 = arith.mulf %191, %191 : vector<128x32xf32>
      %cst_112 = arith.constant dense<0.000000e+00> : vector<32xf32>
      %193 = vector.multi_reduction <add>, %192, %cst_112 [0] : vector<128x32xf32> to vector<32xf32>
      %194 = vector.shape_cast %193 : vector<32xf32> to vector<1x32xf32>
      %cst_113 = arith.constant 1.000000e-24 : f32
      %195 = vector.broadcast %cst_113 : f32 to vector<1x32xf32>
      %196 = arith.maximumf %194, %195 : vector<1x32xf32>
      %197 = math.rsqrt %196 : vector<1x32xf32>
      %198 = vector.broadcast %185 : f32 to vector<1x32xf32>
      %199 = arith.mulf %197, %198 : vector<1x32xf32>
      %200 = vector.broadcast %199 : vector<1x32xf32> to vector<128x32xf32>
      %201 = arith.mulf %191, %200 : vector<128x32xf32>
      %202 = arith.truncf %201 : vector<128x32xf32> to vector<128x32xbf16>
      %c0_114 = arith.constant 0 : index
      %c0_115 = arith.constant 0 : index
      %203 = vector.load %arg17[%c0_114, %c0_115] : memref<128x32xbf16, #tpu.memory_space<vmem>>, vector<128x32xbf16>
      tpu.vector_store %arg17[%c0_114, %c0_115], %202 {strides = array<i32>} : memref<128x32xbf16, #tpu.memory_space<vmem>>, vector<128x32xbf16>,
      %204 = tpu.iota {dimensions = array<i32: 1>} : vector<1x32xi32>
      %c0_116 = arith.constant 0 : index
      %c0_117 = arith.constant 0 : index
      %205 = vector.load %arg18[%c0_116, %c0_117] : memref<1x32xi32, #tpu.memory_space<vmem>>, vector<1x32xi32>
      tpu.vector_store %arg18[%c0_116, %c0_117], %204 {strides = array<i32>} : memref<1x32xi32, #tpu.memory_space<vmem>>, vector<1x32xi32>,
      %206 = tpu.iota {dimensions = array<i32: 0>} : vector<8x1xi32>
      %c0_118 = arith.constant 0 : index
      %c0_119 = arith.constant 0 : index
      %207 = vector.load %arg19[%c0_118, %c0_119] : memref<8x1xi32, #tpu.memory_space<vmem>>, vector<8x1xi32>
      tpu.vector_store %arg19[%c0_118, %c0_119], %206 {strides = array<i32>} : memref<8x1xi32, #tpu.memory_space<vmem>>, vector<8x1xi32>,
      %cst_120 = arith.constant 0xFF800000 : f32
      %208 = vector.broadcast %cst_120 : f32 to vector<1x32xf32>
      %c0_121 = arith.constant 0 : index
      %c0_122 = arith.constant 0 : index
      %c0_123 = arith.constant 0 : index
      %209 = vector.load %arg11[%c0_121, %c0_122, %c0_123] : memref<1x1x32xf32, #tpu.memory_space<vmem>>, vector<1x1x32xf32>
      %210 = vector.shape_cast %209 : vector<1x1x32xf32> to vector<1x32xf32>
      %211 = vector.shape_cast %208 : vector<1x32xf32> to vector<1x1x32xf32>
      tpu.vector_store %arg11[%c0_121, %c0_122, %c0_123], %211 {strides = array<i32>} : memref<1x1x32xf32, #tpu.memory_space<vmem>>, vector<1x1x32xf32>,
      %cst_124 = arith.constant 0.000000e+00 : f32
      %212 = vector.broadcast %cst_124 : f32 to vector<1x32xf32>
      %c0_125 = arith.constant 0 : index
      %c0_126 = arith.constant 0 : index
      %c0_127 = arith.constant 0 : index
      %213 = vector.load %arg12[%c0_125, %c0_126, %c0_127] : memref<1x1x32xf32, #tpu.memory_space<vmem>>, vector<1x1x32xf32>
      %214 = vector.shape_cast %213 : vector<1x1x32xf32> to vector<1x32xf32>
      %215 = vector.shape_cast %212 : vector<1x32xf32> to vector<1x1x32xf32>
      tpu.vector_store %arg12[%c0_125, %c0_126, %c0_127], %215 {strides = array<i32>} : memref<1x1x32xf32, #tpu.memory_space<vmem>>, vector<1x1x32xf32>,
      %c0_i32_128 = arith.constant 0 : i32
      %216 = vector.broadcast %c0_i32_128 : i32 to vector<1x32xi32>
      %c0_129 = arith.constant 0 : index
      %c0_130 = arith.constant 0 : index
      %c0_131 = arith.constant 0 : index
      %217 = vector.load %arg13[%c0_129, %c0_130, %c0_131] : memref<1x1x32xi32, #tpu.memory_space<vmem>>, vector<1x1x32xi32>
      %218 = vector.shape_cast %217 : vector<1x1x32xi32> to vector<1x32xi32>
      %219 = vector.shape_cast %216 : vector<1x32xi32> to vector<1x1x32xi32>
      tpu.vector_store %arg13[%c0_129, %c0_130, %c0_131], %219 {strides = array<i32>} : memref<1x1x32xi32, #tpu.memory_space<vmem>>, vector<1x1x32xi32>,
      %cst_132 = arith.constant 0.000000e+00 : f32
      %220 = vector.broadcast %cst_132 : f32 to vector<1x1xf32>
      %c0_133 = arith.constant 0 : index
      %c0_134 = arith.constant 0 : index
      %c0_135 = arith.constant 0 : index
      %221 = vector.load %arg14[%c0_133, %c0_134, %c0_135] : memref<1x1x1xf32, #tpu.memory_space<vmem>>, vector<1x1x1xf32>
      %222 = vector.shape_cast %221 : vector<1x1x1xf32> to vector<1x1xf32>
      %223 = vector.shape_cast %220 : vector<1x1xf32> to vector<1x1x1xf32>
      tpu.vector_store %arg14[%c0_133, %c0_134, %c0_135], %223 {strides = array<i32>} : memref<1x1x1xf32, #tpu.memory_space<vmem>>, vector<1x1x1xf32>,
      %cst_136 = arith.constant 0.000000e+00 : f32
      %224 = vector.broadcast %cst_136 : f32 to vector<1x1xf32>
      %c0_137 = arith.constant 0 : index
      %c0_138 = arith.constant 0 : index
      %c0_139 = arith.constant 0 : index
      %225 = vector.load %arg15[%c0_137, %c0_138, %c0_139] : memref<1x1x1xf32, #tpu.memory_space<vmem>>, vector<1x1x1xf32>
      %226 = vector.shape_cast %225 : vector<1x1x1xf32> to vector<1x1xf32>
      %227 = vector.shape_cast %224 : vector<1x1xf32> to vector<1x1x1xf32>
      tpu.vector_store %arg15[%c0_137, %c0_138, %c0_139], %227 {strides = array<i32>} : memref<1x1x1xf32, #tpu.memory_space<vmem>>, vector<1x1x1xf32>,
      %cst_140 = arith.constant 0.000000e+00 : f32
      %228 = vector.broadcast %cst_140 : f32 to vector<1x1xf32>
      %c0_141 = arith.constant 0 : index
      %c0_142 = arith.constant 0 : index
      %c0_143 = arith.constant 0 : index
      %229 = vector.load %arg16[%c0_141, %c0_142, %c0_143] : memref<1x1x1xf32, #tpu.memory_space<vmem>>, vector<1x1x1xf32>
      %230 = vector.shape_cast %229 : vector<1x1x1xf32> to vector<1x1xf32>
      %231 = vector.shape_cast %228 : vector<1x1xf32> to vector<1x1x1xf32>
      tpu.vector_store %arg16[%c0_141, %c0_142, %c0_143], %231 {strides = array<i32>} : memref<1x1x1xf32, #tpu.memory_space<vmem>>, vector<1x1x1xf32>,
    } else {
    }
    %c2_i32 = arith.constant 2 : i32
    %3 = arith.muli %arg0, %c2_i32 : i32
    %4 = arith.addi %3, %arg1 : i32
    %c8_i32 = arith.constant 8 : i32
    %5 = arith.muli %4, %c8_i32 : i32
    %cst = arith.constant 0.000000e+00 : f32
    %6 = vector.broadcast %cst : f32 to vector<8x128xf32>
    %c0 = arith.constant 0 : index
    %c0_1 = arith.constant 0 : index
    %c0_2 = arith.constant 0 : index
    %7 = vector.load %arg5[%c0, %c0_1, %c0_2] : memref<4x8x128xbf16, #tpu.memory_space<vmem>>, vector<1x8x128xbf16>
    %8 = vector.shape_cast %7 : vector<1x8x128xbf16> to vector<8x128xbf16>
    %c0_3 = arith.constant 0 : index
    %c0_4 = arith.constant 0 : index
    %9 = vector.load %arg7[%c0_3, %c0_4] : memref<128x128xbf16, #tpu.memory_space<vmem>>, vector<128x128xbf16>
    %cst_5 = arith.constant dense<0.000000e+00> : vector<8x128xf32>
    %10 = tpu.matmul %8, %9, %cst_5 {dimension_numbers = #tpu.dot_dimension_numbers<[1], [0], [0], [1], [0, 0, 1, 1], [], []>} : vector<8x128xbf16>, vector<128x128xbf16>, vector<8x128xf32> -> vector<8x128xf32>
    %c0_6 = arith.constant 0 : index
    %c0_7 = arith.constant 0 : index
    %11 = vector.load %arg8[%c0_6, %c0_7] : memref<1x128xf32, #tpu.memory_space<vmem>>, vector<1x128xf32>
    %12 = vector.broadcast %11 : vector<1x128xf32> to vector<8x128xf32>
    %13 = arith.addf %10, %12 : vector<8x128xf32>
    %14 = arith.mulf %13, %13 : vector<8x128xf32>
    %cst_8 = arith.constant dense<0.000000e+00> : vector<8xf32>
    %15 = vector.multi_reduction <add>, %14, %cst_8 [1] : vector<8x128xf32> to vector<8xf32>
    %16 = vector.shape_cast %15 : vector<8xf32> to vector<8x1xf32>
    %cst_9 = arith.constant 1.000000e-24 : f32
    %17 = vector.broadcast %cst_9 : f32 to vector<8x1xf32>
    %18 = arith.maximumf %16, %17 : vector<8x1xf32>
    %19 = math.rsqrt %18 : vector<8x1xf32>
    %20 = vector.broadcast %19 : vector<8x1xf32> to vector<8x128xf32>
    %21 = arith.mulf %13, %20 : vector<8x128xf32>
    %22 = arith.addf %6, %21 : vector<8x128xf32>
    %c1 = arith.constant 1 : index
    %c0_10 = arith.constant 0 : index
    %c0_11 = arith.constant 0 : index
    %23 = vector.load %arg5[%c1, %c0_10, %c0_11] : memref<4x8x128xbf16, #tpu.memory_space<vmem>>, vector<1x8x128xbf16>
    %24 = vector.shape_cast %23 : vector<1x8x128xbf16> to vector<8x128xbf16>
    %c0_12 = arith.constant 0 : index
    %c0_13 = arith.constant 0 : index
    %25 = vector.load %arg7[%c0_12, %c0_13] : memref<128x128xbf16, #tpu.memory_space<vmem>>, vector<128x128xbf16>
    %cst_14 = arith.constant dense<0.000000e+00> : vector<8x128xf32>
    %26 = tpu.matmul %24, %25, %cst_14 {dimension_numbers = #tpu.dot_dimension_numbers<[1], [0], [0], [1], [0, 0, 1, 1], [], []>} : vector<8x128xbf16>, vector<128x128xbf16>, vector<8x128xf32> -> vector<8x128xf32>
    %c0_15 = arith.constant 0 : index
    %c0_16 = arith.constant 0 : index
    %27 = vector.load %arg8[%c0_15, %c0_16] : memref<1x128xf32, #tpu.memory_space<vmem>>, vector<1x128xf32>
    %28 = vector.broadcast %27 : vector<1x128xf32> to vector<8x128xf32>
    %29 = arith.addf %26, %28 : vector<8x128xf32>
    %30 = arith.mulf %29, %29 : vector<8x128xf32>
    %cst_17 = arith.constant dense<0.000000e+00> : vector<8xf32>
    %31 = vector.multi_reduction <add>, %30, %cst_17 [1] : vector<8x128xf32> to vector<8xf32>
    %32 = vector.shape_cast %31 : vector<8xf32> to vector<8x1xf32>
    %cst_18 = arith.constant 1.000000e-24 : f32
    %33 = vector.broadcast %cst_18 : f32 to vector<8x1xf32>
    %34 = arith.maximumf %32, %33 : vector<8x1xf32>
    %35 = math.rsqrt %34 : vector<8x1xf32>
    %36 = vector.broadcast %35 : vector<8x1xf32> to vector<8x128xf32>
    %37 = arith.mulf %29, %36 : vector<8x128xf32>
    %38 = arith.addf %22, %37 : vector<8x128xf32>
    %c2 = arith.constant 2 : index
    %c0_19 = arith.constant 0 : index
    %c0_20 = arith.constant 0 : index
    %39 = vector.load %arg5[%c2, %c0_19, %c0_20] : memref<4x8x128xbf16, #tpu.memory_space<vmem>>, vector<1x8x128xbf16>
    %40 = vector.shape_cast %39 : vector<1x8x128xbf16> to vector<8x128xbf16>
    %c0_21 = arith.constant 0 : index
    %c0_22 = arith.constant 0 : index
    %41 = vector.load %arg7[%c0_21, %c0_22] : memref<128x128xbf16, #tpu.memory_space<vmem>>, vector<128x128xbf16>
    %cst_23 = arith.constant dense<0.000000e+00> : vector<8x128xf32>
    %42 = tpu.matmul %40, %41, %cst_23 {dimension_numbers = #tpu.dot_dimension_numbers<[1], [0], [0], [1], [0, 0, 1, 1], [], []>} : vector<8x128xbf16>, vector<128x128xbf16>, vector<8x128xf32> -> vector<8x128xf32>
    %c0_24 = arith.constant 0 : index
    %c0_25 = arith.constant 0 : index
    %43 = vector.load %arg8[%c0_24, %c0_25] : memref<1x128xf32, #tpu.memory_space<vmem>>, vector<1x128xf32>
    %44 = vector.broadcast %43 : vector<1x128xf32> to vector<8x128xf32>
    %45 = arith.addf %42, %44 : vector<8x128xf32>
    %46 = arith.mulf %45, %45 : vector<8x128xf32>
    %cst_26 = arith.constant dense<0.000000e+00> : vector<8xf32>
    %47 = vector.multi_reduction <add>, %46, %cst_26 [1] : vector<8x128xf32> to vector<8xf32>
    %48 = vector.shape_cast %47 : vector<8xf32> to vector<8x1xf32>
    %cst_27 = arith.constant 1.000000e-24 : f32
    %49 = vector.broadcast %cst_27 : f32 to vector<8x1xf32>
    %50 = arith.maximumf %48, %49 : vector<8x1xf32>
    %51 = math.rsqrt %50 : vector<8x1xf32>
    %52 = vector.broadcast %51 : vector<8x1xf32> to vector<8x128xf32>
    %53 = arith.mulf %45, %52 : vector<8x128xf32>
    %54 = arith.addf %38, %53 : vector<8x128xf32>
    %c3 = arith.constant 3 : index
    %c0_28 = arith.constant 0 : index
    %c0_29 = arith.constant 0 : index
    %55 = vector.load %arg5[%c3, %c0_28, %c0_29] : memref<4x8x128xbf16, #tpu.memory_space<vmem>>, vector<1x8x128xbf16>
    %56 = vector.shape_cast %55 : vector<1x8x128xbf16> to vector<8x128xbf16>
    %c0_30 = arith.constant 0 : index
    %c0_31 = arith.constant 0 : index
    %57 = vector.load %arg7[%c0_30, %c0_31] : memref<128x128xbf16, #tpu.memory_space<vmem>>, vector<128x128xbf16>
    %cst_32 = arith.constant dense<0.000000e+00> : vector<8x128xf32>
    %58 = tpu.matmul %56, %57, %cst_32 {dimension_numbers = #tpu.dot_dimension_numbers<[1], [0], [0], [1], [0, 0, 1, 1], [], []>} : vector<8x128xbf16>, vector<128x128xbf16>, vector<8x128xf32> -> vector<8x128xf32>
    %c0_33 = arith.constant 0 : index
    %c0_34 = arith.constant 0 : index
    %59 = vector.load %arg8[%c0_33, %c0_34] : memref<1x128xf32, #tpu.memory_space<vmem>>, vector<1x128xf32>
    %60 = vector.broadcast %59 : vector<1x128xf32> to vector<8x128xf32>
    %61 = arith.addf %58, %60 : vector<8x128xf32>
    %62 = arith.mulf %61, %61 : vector<8x128xf32>
    %cst_35 = arith.constant dense<0.000000e+00> : vector<8xf32>
    %63 = vector.multi_reduction <add>, %62, %cst_35 [1] : vector<8x128xf32> to vector<8xf32>
    %64 = vector.shape_cast %63 : vector<8xf32> to vector<8x1xf32>
    %cst_36 = arith.constant 1.000000e-24 : f32
    %65 = vector.broadcast %cst_36 : f32 to vector<8x1xf32>
    %66 = arith.maximumf %64, %65 : vector<8x1xf32>
    %67 = math.rsqrt %66 : vector<8x1xf32>
    %68 = vector.broadcast %67 : vector<8x1xf32> to vector<8x128xf32>
    %69 = arith.mulf %61, %68 : vector<8x128xf32>
    %70 = arith.addf %54, %69 : vector<8x128xf32>
    %cst_37 = arith.constant 2.500000e-01 : f32
    %71 = vector.broadcast %cst_37 : f32 to vector<8x128xf32>
    %72 = arith.mulf %70, %71 : vector<8x128xf32>
    %73 = arith.truncf %72 : vector<8x128xf32> to vector<8x128xbf16>
    %c0_38 = arith.constant 0 : index
    %c0_39 = arith.constant 0 : index
    %74 = vector.load %arg17[%c0_38, %c0_39] : memref<128x32xbf16, #tpu.memory_space<vmem>>, vector<128x32xbf16>
    %cst_40 = arith.constant dense<0.000000e+00> : vector<8x32xf32>
    %75 = tpu.matmul %73, %74, %cst_40 {dimension_numbers = #tpu.dot_dimension_numbers<[1], [0], [0], [1], [0, 0, 1, 1], [], []>} : vector<8x128xbf16>, vector<128x32xbf16>, vector<8x32xf32> -> vector<8x32xf32>
    %c0_41 = arith.constant 0 : index
    %c0_42 = arith.constant 0 : index
    %76 = vector.load %arg3[%c0_41, %c0_42] : memref<8x1xi32, #tpu.memory_space<vmem>>, vector<8x1xi32>
    %c0_43 = arith.constant 0 : index
    %c0_44 = arith.constant 0 : index
    %77 = vector.load %arg4[%c0_43, %c0_44] : memref<1x32xi32, #tpu.memory_space<vmem>>, vector<1x32xi32>
    %78 = vector.broadcast %76 : vector<8x1xi32> to vector<8x32xi32>
    %79 = vector.broadcast %77 : vector<1x32xi32> to vector<8x32xi32>
    %80 = arith.cmpi eq, %78, %79 : vector<8x32xi32>
    %81 = arith.extui %80 : vector<8x32xi1> to vector<8x32xi32>
    %82 = arith.sitofp %81 : vector<8x32xi32> to vector<8x32xf32>
    %cst_45 = arith.constant dense<0.000000e+00> : vector<8xf32>
    %83 = vector.multi_reduction <add>, %82, %cst_45 [1] : vector<8x32xf32> to vector<8xf32>
    %84 = vector.shape_cast %83 : vector<8xf32> to vector<8x1xf32>
    %85 = tpu.reciprocal %84 {approx = true} : vector<8x1xf32> -> vector<8x1xf32>
    %cst_46 = arith.constant dense<0xFF800000> : vector<8xf32>
    %86 = vector.multi_reduction <maximumf>, %75, %cst_46 [1] : vector<8x32xf32> to vector<8xf32>
    %87 = vector.shape_cast %86 : vector<8xf32> to vector<8x1xf32>
    %88 = vector.broadcast %87 : vector<8x1xf32> to vector<8x32xf32>
    %89 = arith.subf %75, %88 : vector<8x32xf32>
    %90 = math.exp %89 : vector<8x32xf32>
    %cst_47 = arith.constant dense<0.000000e+00> : vector<8xf32>
    %91 = vector.multi_reduction <add>, %90, %cst_47 [1] : vector<8x32xf32> to vector<8xf32>
    %92 = vector.shape_cast %91 : vector<8xf32> to vector<8x1xf32>
    %93 = math.log %92 : vector<8x1xf32>
    %94 = arith.addf %87, %93 : vector<8x1xf32>
    %c0_48 = arith.constant 0 : index
    %c0_49 = arith.constant 0 : index
    %c0_50 = arith.constant 0 : index
    %95 = vector.load %arg14[%c0_48, %c0_49, %c0_50] : memref<1x1x1xf32, #tpu.memory_space<vmem>>, vector<1x1x1xf32>
    %96 = vector.shape_cast %95 : vector<1x1x1xf32> to vector<1x1xf32>
    %cst_51 = arith.constant dense<0.000000e+00> : vector<1xf32>
    %97 = vector.multi_reduction <add>, %94, %cst_51 [0] : vector<8x1xf32> to vector<1xf32>
    %98 = vector.shape_cast %97 : vector<1xf32> to vector<1x1xf32>
    %99 = arith.addf %96, %98 : vector<1x1xf32>
    %c0_52 = arith.constant 0 : index
    %c0_53 = arith.constant 0 : index
    %c0_54 = arith.constant 0 : index
    %100 = vector.load %arg14[%c0_52, %c0_53, %c0_54] : memref<1x1x1xf32, #tpu.memory_space<vmem>>, vector<1x1x1xf32>
    %101 = vector.shape_cast %100 : vector<1x1x1xf32> to vector<1x1xf32>
    %102 = vector.shape_cast %99 : vector<1x1xf32> to vector<1x1x1xf32>
    tpu.vector_store %arg14[%c0_52, %c0_53, %c0_54], %102 {strides = array<i32>} : memref<1x1x1xf32, #tpu.memory_space<vmem>>, vector<1x1x1xf32>,
    %c0_55 = arith.constant 0 : index
    %c0_56 = arith.constant 0 : index
    %c0_57 = arith.constant 0 : index
    %103 = vector.load %arg15[%c0_55, %c0_56, %c0_57] : memref<1x1x1xf32, #tpu.memory_space<vmem>>, vector<1x1x1xf32>
    %104 = vector.shape_cast %103 : vector<1x1x1xf32> to vector<1x1xf32>
    %105 = arith.mulf %82, %75 : vector<8x32xf32>
    %cst_58 = arith.constant dense<0.000000e+00> : vector<8xf32>
    %106 = vector.multi_reduction <add>, %105, %cst_58 [1] : vector<8x32xf32> to vector<8xf32>
    %107 = vector.shape_cast %106 : vector<8xf32> to vector<8x1xf32>
    %108 = arith.mulf %107, %85 : vector<8x1xf32>
    %cst_59 = arith.constant dense<0.000000e+00> : vector<1xf32>
    %109 = vector.multi_reduction <add>, %108, %cst_59 [0] : vector<8x1xf32> to vector<1xf32>
    %110 = vector.shape_cast %109 : vector<1xf32> to vector<1x1xf32>
    %111 = arith.addf %104, %110 : vector<1x1xf32>
    %c0_60 = arith.constant 0 : index
    %c0_61 = arith.constant 0 : index
    %c0_62 = arith.constant 0 : index
    %112 = vector.load %arg15[%c0_60, %c0_61, %c0_62] : memref<1x1x1xf32, #tpu.memory_space<vmem>>, vector<1x1x1xf32>
    %113 = vector.shape_cast %112 : vector<1x1x1xf32> to vector<1x1xf32>
    %114 = vector.shape_cast %111 : vector<1x1xf32> to vector<1x1x1xf32>
    tpu.vector_store %arg15[%c0_60, %c0_61, %c0_62], %114 {strides = array<i32>} : memref<1x1x1xf32, #tpu.memory_space<vmem>>, vector<1x1x1xf32>,
    %115 = vector.broadcast %87 : vector<8x1xf32> to vector<8x32xf32>
    %116 = arith.cmpf oge, %75, %115 : vector<8x32xf32>
    %c0_63 = arith.constant 0 : index
    %c0_64 = arith.constant 0 : index
    %117 = vector.load %arg18[%c0_63, %c0_64] : memref<1x32xi32, #tpu.memory_space<vmem>>, vector<1x32xi32>
    %c32_i32 = arith.constant 32 : i32
    %118 = vector.shape_cast %117 : vector<1x32xi32> to vector<1x32xi32>
    %119 = vector.broadcast %118 : vector<1x32xi32> to vector<8x32xi32>
    %120 = vector.broadcast %c32_i32 : i32 to vector<8x32xi32>
    %121 = arith.select %116, %119, %120 : vector<8x32xi1>, vector<8x32xi32>
    %cst_65 = arith.constant dense<2147483647> : vector<8xi32>
    %122 = vector.multi_reduction <minsi>, %121, %cst_65 [1] : vector<8x32xi32> to vector<8xi32>
    %123 = vector.shape_cast %122 : vector<8xi32> to vector<8x1xi32>
    %c0_66 = arith.constant 0 : index
    %c0_67 = arith.constant 0 : index
    %124 = vector.load %arg19[%c0_66, %c0_67] : memref<8x1xi32, #tpu.memory_space<vmem>>, vector<8x1xi32>
    %125 = vector.broadcast %5 : i32 to vector<8x1xi32>
    %126 = arith.addi %125, %124 : vector<8x1xi32>
    %c0_68 = arith.constant 0 : index
    %c0_69 = arith.constant 0 : index
    %c0_70 = arith.constant 0 : index
    %127 = vector.load %arg16[%c0_68, %c0_69, %c0_70] : memref<1x1x1xf32, #tpu.memory_space<vmem>>, vector<1x1x1xf32>
    %128 = vector.shape_cast %127 : vector<1x1x1xf32> to vector<1x1xf32>
    %129 = arith.cmpi eq, %123, %126 : vector<8x1xi32>
    %130 = arith.extui %129 : vector<8x1xi1> to vector<8x1xi32>
    %131 = arith.sitofp %130 : vector<8x1xi32> to vector<8x1xf32>
    %cst_71 = arith.constant dense<0.000000e+00> : vector<1xf32>
    %132 = vector.multi_reduction <add>, %131, %cst_71 [0] : vector<8x1xf32> to vector<1xf32>
    %133 = vector.shape_cast %132 : vector<1xf32> to vector<1x1xf32>
    %134 = arith.addf %128, %133 : vector<1x1xf32>
    %c0_72 = arith.constant 0 : index
    %c0_73 = arith.constant 0 : index
    %c0_74 = arith.constant 0 : index
    %135 = vector.load %arg16[%c0_72, %c0_73, %c0_74] : memref<1x1x1xf32, #tpu.memory_space<vmem>>, vector<1x1x1xf32>
    %136 = vector.shape_cast %135 : vector<1x1x1xf32> to vector<1x1xf32>
    %137 = vector.shape_cast %134 : vector<1x1xf32> to vector<1x1x1xf32>
    tpu.vector_store %arg16[%c0_72, %c0_73, %c0_74], %137 {strides = array<i32>} : memref<1x1x1xf32, #tpu.memory_space<vmem>>, vector<1x1x1xf32>,
    %cst_75 = arith.constant dense<0xFF800000> : vector<32xf32>
    %138 = vector.multi_reduction <maximumf>, %75, %cst_75 [0] : vector<8x32xf32> to vector<32xf32>
    %139 = vector.shape_cast %138 : vector<32xf32> to vector<1x32xf32>
    %c0_76 = arith.constant 0 : index
    %c0_77 = arith.constant 0 : index
    %c0_78 = arith.constant 0 : index
    %140 = vector.load %arg11[%c0_76, %c0_77, %c0_78] : memref<1x1x32xf32, #tpu.memory_space<vmem>>, vector<1x1x32xf32>
    %141 = vector.shape_cast %140 : vector<1x1x32xf32> to vector<1x32xf32>
    %142 = arith.maximumf %141, %139 : vector<1x32xf32>
    %143 = math.exp %87 : vector<8x1xf32>
    %144 = vector.broadcast %143 : vector<8x1xf32> to vector<8x32xf32>
    %145 = arith.mulf %90, %144 : vector<8x32xf32>
    %cst_79 = arith.constant dense<0.000000e+00> : vector<32xf32>
    %146 = vector.multi_reduction <add>, %145, %cst_79 [0] : vector<8x32xf32> to vector<32xf32>
    %147 = vector.shape_cast %146 : vector<32xf32> to vector<1x32xf32>
    %c0_80 = arith.constant 0 : index
    %c0_81 = arith.constant 0 : index
    %c0_82 = arith.constant 0 : index
    %148 = vector.load %arg12[%c0_80, %c0_81, %c0_82] : memref<1x1x32xf32, #tpu.memory_space<vmem>>, vector<1x1x32xf32>
    %149 = vector.shape_cast %148 : vector<1x1x32xf32> to vector<1x32xf32>
    %150 = arith.subf %141, %142 : vector<1x32xf32>
    %151 = math.exp %150 : vector<1x32xf32>
    %152 = arith.mulf %149, %151 : vector<1x32xf32>
    %cst_83 = arith.constant 0.000000e+00 : f32
    %153 = vector.broadcast %cst_83 : f32 to vector<1x32xf32>
    %154 = arith.subf %153, %142 : vector<1x32xf32>
    %155 = math.exp %154 : vector<1x32xf32>
    %156 = arith.mulf %147, %155 : vector<1x32xf32>
    %157 = arith.addf %152, %156 : vector<1x32xf32>
    %c0_84 = arith.constant 0 : index
    %c0_85 = arith.constant 0 : index
    %c0_86 = arith.constant 0 : index
    %158 = vector.load %arg12[%c0_84, %c0_85, %c0_86] : memref<1x1x32xf32, #tpu.memory_space<vmem>>, vector<1x1x32xf32>
    %159 = vector.shape_cast %158 : vector<1x1x32xf32> to vector<1x32xf32>
    %160 = vector.shape_cast %157 : vector<1x32xf32> to vector<1x1x32xf32>
    tpu.vector_store %arg12[%c0_84, %c0_85, %c0_86], %160 {strides = array<i32>} : memref<1x1x32xf32, #tpu.memory_space<vmem>>, vector<1x1x32xf32>,
    %161 = vector.broadcast %139 : vector<1x32xf32> to vector<8x32xf32>
    %162 = arith.cmpf oge, %75, %161 : vector<8x32xf32>
    %c0_87 = arith.constant 0 : index
    %c0_88 = arith.constant 0 : index
    %163 = vector.load %arg19[%c0_87, %c0_88] : memref<8x1xi32, #tpu.memory_space<vmem>>, vector<8x1xi32>
    %c8_i32_89 = arith.constant 8 : i32
    %164 = vector.shape_cast %163 : vector<8x1xi32> to vector<8x1xi32>
    %165 = vector.broadcast %164 : vector<8x1xi32> to vector<8x32xi32>
    %166 = vector.broadcast %c8_i32_89 : i32 to vector<8x32xi32>
    %167 = arith.select %162, %165, %166 : vector<8x32xi1>, vector<8x32xi32>
    %cst_90 = arith.constant dense<2147483647> : vector<32xi32>
    %168 = vector.multi_reduction <minsi>, %167, %cst_90 [0] : vector<8x32xi32> to vector<32xi32>
    %169 = vector.shape_cast %168 : vector<32xi32> to vector<1x32xi32>
    %170 = vector.broadcast %5 : i32 to vector<1x32xi32>
    %171 = arith.addi %170, %169 : vector<1x32xi32>
    %172 = arith.cmpf ogt, %139, %141 : vector<1x32xf32>
    %c0_91 = arith.constant 0 : index
    %c0_92 = arith.constant 0 : index
    %c0_93 = arith.constant 0 : index
    %173 = vector.load %arg13[%c0_91, %c0_92, %c0_93] : memref<1x1x32xi32, #tpu.memory_space<vmem>>, vector<1x1x32xi32>
    %174 = vector.shape_cast %173 : vector<1x1x32xi32> to vector<1x32xi32>
    %175 = arith.select %172, %171, %174 : vector<1x32xi1>, vector<1x32xi32>
    %c0_94 = arith.constant 0 : index
    %c0_95 = arith.constant 0 : index
    %c0_96 = arith.constant 0 : index
    %176 = vector.load %arg13[%c0_94, %c0_95, %c0_96] : memref<1x1x32xi32, #tpu.memory_space<vmem>>, vector<1x1x32xi32>
    %177 = vector.shape_cast %176 : vector<1x1x32xi32> to vector<1x32xi32>
    %178 = vector.shape_cast %175 : vector<1x32xi32> to vector<1x1x32xi32>
    tpu.vector_store %arg13[%c0_94, %c0_95, %c0_96], %178 {strides = array<i32>} : memref<1x1x32xi32, #tpu.memory_space<vmem>>, vector<1x1x32xi32>,
    %c0_97 = arith.constant 0 : index
    %c0_98 = arith.constant 0 : index
    %c0_99 = arith.constant 0 : index
    %179 = vector.load %arg11[%c0_97, %c0_98, %c0_99] : memref<1x1x32xf32, #tpu.memory_space<vmem>>, vector<1x1x32xf32>
    %180 = vector.shape_cast %179 : vector<1x1x32xf32> to vector<1x32xf32>
    %181 = vector.shape_cast %142 : vector<1x32xf32> to vector<1x1x32xf32>
    tpu.vector_store %arg11[%c0_97, %c0_98, %c0_99], %181 {strides = array<i32>} : memref<1x1x32xf32, #tpu.memory_space<vmem>>, vector<1x1x32xf32>,
    return
  }
  func.func @transform_0(%arg0: i32, %arg1: i32) -> (i32, i32) {
    %c0_i32 = arith.constant 0 : i32
    %c0_i32_0 = arith.constant 0 : i32
    %c0_i32_1 = arith.constant 0 : i32
    return %c0_i32, %c0_i32_0 : i32, i32
  }
  func.func @transform_1(%arg0: i32, %arg1: i32) -> (i32, i32) {
    %c2_i32 = arith.constant 2 : i32
    %0 = arith.muli %arg0, %c2_i32 : i32
    %1 = arith.addi %0, %arg1 : i32
    %c0_i32 = arith.constant 0 : i32
    %c0_i32_0 = arith.constant 0 : i32
    return %1, %c0_i32 : i32, i32
  }
  func.func @transform_2(%arg0: i32, %arg1: i32) -> (i32, i32) {
    %c0_i32 = arith.constant 0 : i32
    %c0_i32_0 = arith.constant 0 : i32
    %c0_i32_1 = arith.constant 0 : i32
    return %c0_i32, %c0_i32_0 : i32, i32
  }
  func.func @transform_3(%arg0: i32, %arg1: i32) -> (i32, i32, i32) {
    %c2_i32 = arith.constant 2 : i32
    %0 = arith.muli %arg0, %c2_i32 : i32
    %1 = arith.addi %0, %arg1 : i32
    %c0_i32 = arith.constant 0 : i32
    %c0_i32_0 = arith.constant 0 : i32
    %c0_i32_1 = arith.constant 0 : i32
    return %c0_i32, %1, %c0_i32_0 : i32, i32, i32
  }
  func.func @transform_4(%arg0: i32, %arg1: i32) -> (i32, i32) {
    %c0_i32 = arith.constant 0 : i32
    %c0_i32_0 = arith.constant 0 : i32
    %c0_i32_1 = arith.constant 0 : i32
    return %c0_i32, %c0_i32_0 : i32, i32
  }
  func.func @transform_5(%arg0: i32, %arg1: i32) -> (i32, i32) {
    %c0_i32 = arith.constant 0 : i32
    %c0_i32_0 = arith.constant 0 : i32
    %c0_i32_1 = arith.constant 0 : i32
    return %c0_i32, %c0_i32_0 : i32, i32
  }
  func.func @transform_6(%arg0: i32, %arg1: i32) -> (i32, i32) {
    %c0_i32 = arith.constant 0 : i32
    %c0_i32_0 = arith.constant 0 : i32
    %c0_i32_1 = arith.constant 0 : i32
    return %c0_i32, %c0_i32_0 : i32, i32
  }
  func.func @transform_7(%arg0: i32, %arg1: i32) -> (i32, i32) {
    %c0_i32 = arith.constant 0 : i32
    %c0_i32_0 = arith.constant 0 : i32
    %c0_i32_1 = arith.constant 0 : i32
    return %c0_i32, %c0_i32_0 : i32, i32
  }
  func.func @transform_8(%arg0: i32, %arg1: i32) -> (i32, i32) {
    %c0_i32 = arith.constant 0 : i32
    %c0_i32_0 = arith.constant 0 : i32
    %c0_i32_1 = arith.constant 0 : i32
    return %c0_i32, %c0_i32_0 : i32, i32
  }
  func.func @transform_9(%arg0: i32, %arg1: i32) -> (i32, i32, i32) {
    %c0_i32 = arith.constant 0 : i32
    %c0_i32_0 = arith.constant 0 : i32
    %c0_i32_1 = arith.constant 0 : i32
    return %arg0, %c0_i32, %c0_i32_0 : i32, i32, i32
  }
  func.func @transform_10(%arg0: i32, %arg1: i32) -> (i32, i32, i32) {
    %c0_i32 = arith.constant 0 : i32
    %c0_i32_0 = arith.constant 0 : i32
    %c0_i32_1 = arith.constant 0 : i32
    return %arg0, %c0_i32, %c0_i32_0 : i32, i32, i32
  }
  func.func @transform_11(%arg0: i32, %arg1: i32) -> (i32, i32, i32) {
    %c0_i32 = arith.constant 0 : i32
    %c0_i32_0 = arith.constant 0 : i32
    %c0_i32_1 = arith.constant 0 : i32
    return %arg0, %c0_i32, %c0_i32_0 : i32, i32, i32
  }
  func.func @transform_12(%arg0: i32, %arg1: i32) -> (i32, i32, i32) {
    %c0_i32 = arith.constant 0 : i32
    %c0_i32_0 = arith.constant 0 : i32
    %c0_i32_1 = arith.constant 0 : i32
    return %arg0, %c0_i32, %c0_i32_0 : i32, i32, i32
  }
  func.func @transform_13(%arg0: i32, %arg1: i32) -> (i32, i32, i32) {
    %c0_i32 = arith.constant 0 : i32
    %c0_i32_0 = arith.constant 0 : i32
    %c0_i32_1 = arith.constant 0 : i32
    return %arg0, %c0_i32, %c0_i32_0 : i32, i32, i32
  }
  func.func @transform_14(%arg0: i32, %arg1: i32) -> (i32, i32, i32) {
    %c0_i32 = arith.constant 0 : i32
    %c0_i32_0 = arith.constant 0 : i32
    %c0_i32_1 = arith.constant 0 : i32
    return %arg0, %c0_i32, %c0_i32_0 : i32, i32, i32
  }
}

</mosaic_0001>

<llo_original>
// kernel: tpu_custom_call.1
$region0: #{tpu_custom_call.1}
  #allocation0 [shape = 'u32[]', space=smem, size = 0x4, offset = 0x4, fixed_abs, tag = 'smem constant byte address 0x4 - core index']
  #allocation1 [shape = 'u32[144,128]{1,0:T(1,128)}', space=vmem, size = 0x12000, scoped, tag = 'internal scratch']
  #allocation2 [shape = 'bf16[128,32]{1,0:T(16,128)(2,1)}', space=vmem, size = 0x8000, scoped, tag = 'scratch operand']
  #allocation3 [shape = 's32[1,32]{1,0:T(1,128)}', space=vmem, size = 0x200, scoped, tag = 'scratch operand']
  #allocation4 [shape = 's32[8,1]{1,0:T(8,128)}', space=vmem, size = 0x1000, scoped, tag = 'scratch operand']
  #allocation5 [shape = 'f32[1,1]{1,0:T(1,128)S(6)}', space=smem, size = 0x200, scoped, tag = 'scoped memory for tpu_custom_call.1']
  %s0 = inlined_call_operand.<no memory space> [shape: f32[1,1], index: 0, kind: input, shape index: {}]
  %s1 = inlined_call_operand.vmem [shape: s32[32,1], index: 1, kind: input, shape index: {}]
  %s2 = inlined_call_operand.vmem [shape: s32[1,32], index: 2, kind: input, shape index: {}]
  %s3 = inlined_call_operand.vmem [shape: bf16[4,32,128], index: 3, kind: input, shape index: {}]
  %s4 = inlined_call_operand.vmem [shape: bf16[128,32], index: 4, kind: input, shape index: {}]
  %s5 = inlined_call_operand.vmem [shape: bf16[128,128], index: 5, kind: input, shape index: {}]
  %s6 = inlined_call_operand.vmem [shape: f32[1,128], index: 6, kind: input, shape index: {}]
  %s7 = inlined_call_operand.vmem [shape: bf16[128,128], index: 7, kind: input, shape index: {}]
  %s8 = inlined_call_operand.vmem [shape: f32[128,1], index: 8, kind: input, shape index: {}]
  %s9 = inlined_call_operand.hbm [shape: f32[2,1,32], index: 9, kind: output, shape index: {0}]
  %s10 = inlined_call_operand.hbm [shape: f32[2,1,32], index: 10, kind: output, shape index: {1}]
  %s11 = inlined_call_operand.hbm [shape: s32[2,1,32], index: 11, kind: output, shape index: {2}]
  %s12 = inlined_call_operand.vmem [shape: f32[2,1,1], index: 12, kind: output, shape index: {3}]
  %s13 = inlined_call_operand.vmem [shape: f32[2,1,1], index: 13, kind: output, shape index: {4}]
  %s14 = inlined_call_operand.vmem [shape: f32[2,1,1], index: 14, kind: output, shape index: {5}]
  %15 = xla_tuple %s9, %s10, %s11, %s12, %s13, %s14
  %s16 = sld [smem:[#allocation0]]
  $region154: #{tpu_custom_call.1} parent=0
    _
  %s18 = ssub.s32 1, %s16
  %s19 = scalar_select 0, %s18, %s16
  %20 = sst [smem:[#allocation5]] %s0
  $region1: #{tpu_custom_call.1} parent=0
    #allocation6 [shape = 'u8[16384]{0}', space=vmem, size = 0x4000, scoped, tag = 'input window, operand 3']
    #allocation7 [shape = 'u8[1024]{0}', space=vmem, size = 0x400, scoped, tag = 'output window, operand 0']
    #allocation8 [shape = 's32[2]{0}', space=sflag, size = 0x8, scoped, tag = 'scoped memory for tpu_custom_call.1']
    #allocation9 [shape = 'u8[1024]{0}', space=vmem, size = 0x400, scoped, tag = 'output window, operand 1']
    #allocation10 [shape = 's32[2]{0}', space=sflag, size = 0x8, scoped, tag = 'scoped memory for tpu_custom_call.1']
    #allocation11 [shape = 'u8[1024]{0}', space=vmem, size = 0x400, scoped, tag = 'output window, operand 2']
    %21 = vsyncpa [#allocation8], 0
    %s22 = scalar_lea.sflag [#allocation8], 1
    %23 = vsyncpa %s22, 0
    %24 = vsyncpa [#allocation10], 0
    %s25 = scalar_lea.sflag [#allocation10], 1
    %26 = vsyncpa %s25, 0
    loop: start=0, step=1, limit=6
    $region2: #{tpu_custom_call.1} parent=1 // loop_pre_header
      _
    $region3: #{tpu_custom_call.1} parent=1 // loop_header
      %s28 = sphi 0, %s32
      %p29 = scmp.ge.s32.totalorder %s28, 6
      %s35 = sphi 0, %s47
      %s36 = sphi 0, %s43
      %s37 = sphi 0, %s35
      %s38 = sphi 0, %s36
      %s39 = sphi 0, %s37
      %s40 = sphi 0, %s38
      %s48 = sphi 0, %s48
      %s50 = sphi 0, %s48
      %s51 = sphi 0, %s50
      %s65 = sphi 0, %s51
      %s75 = sphi 0, %s77
      %s78 = sphi 0, %s75
      %s79 = sphi 0, %s78
      %s95 = sphi 0, %s79
      %s99 = sphi 0, %s99
      %s101 = sphi 0, %s99
      %s102 = sphi 0, %s101
      %s116 = sphi 0, %s102
      %s126 = sphi 0, %s128
      %s129 = sphi 0, %s126
      %s130 = sphi 0, %s129
      %s146 = sphi 0, %s130
      %s150 = sphi 0, %s150
      %s152 = sphi 0, %s150
      %s153 = sphi 0, %s152
      %s167 = sphi 0, %s153
      %s171 = sphi 0, %s171
      %s173 = sphi 0, %s171
      %s174 = sphi 0, %s173
      %s188 = sphi 0, %s174
      %s192 = sphi 0, %s192
      %s194 = sphi 0, %s192
      %s195 = sphi 0, %s194
      %s209 = sphi 0, %s195
      %s213 = sphi 0, %s213
      %s215 = sphi 0, %s213
      %s216 = sphi 0, %s215
      %s230 = sphi 0, %s216
      %s234 = sphi 0, %s234
      %s236 = sphi 0, %s234
      %s237 = sphi 0, %s236
      %s251 = sphi 0, %s237
      %s257 = sphi 0, %s259
      %s260 = sphi 0, %s257
      %s261 = sphi 0, %s260
      %s277 = sphi 0, %s261
      %s283 = sphi 0, %s285
      %s286 = sphi 0, %s283
      %s287 = sphi 0, %s286
      %s303 = sphi 0, %s287
      %s309 = sphi 0, %s311
      %s312 = sphi 0, %s309
      %s313 = sphi 0, %s312
      %s329 = sphi 0, %s313
      %s335 = sphi 0, %s337
      %s338 = sphi 0, %s335
      %s339 = sphi 0, %s338
      %s355 = sphi 0, %s339
      %s361 = sphi 0, %s363
      %s364 = sphi 0, %s361
      %s365 = sphi 0, %s364
      %s381 = sphi 0, %s365
      %s387 = sphi 0, %s389
      %s390 = sphi 0, %s387
      %s391 = sphi 0, %s390
      %s407 = sphi 0, %s391
    $region4: #{tpu_custom_call.1} parent=1 // loop_header_branch
      %31 = sbr.rel (%p29) target = $region8
    $region5: #{tpu_custom_call.1} parent=1 // loop_body
      %s33 = ssub.s32 %s28, 1
      %s34 = ssub.s32 %s28, 2
      %s41 = sadd.s32 1, %s36
      %p42 = scmp.ge.s32.totalorder %s41, 2
      %s43 = scalar_select %p42, 0, %s41
      %s44 = sadd.s32 1, %s35
      %s45 = scalar_select %p42, %s44, %s35
      %p46 = scmp.ge.s32.totalorder %s45, 2
      %s47 = scalar_select %p46, 0, %s45
      %s49 = sadd.s32 %s48, 1
      %p52 = scmp.eq.s32.totalorder %s28, 3
      %p53 = scmp.ne.s32.totalorder %s48, %s50
      %p54 = scmp.eq.s32.totalorder %s28, 0
      %p55 = por %p53, %p54
      %p56 = scmp.ne.s32.totalorder %s48, %s50
      %p57 = scmp.eq.s32.totalorder %s33, 3
      %p58 = por %p56, %p57
      %p59 = scmp.ne.s32.totalorder %s50, %s51
      %p60 = scmp.eq.s32.totalorder %s33, 0
      %p61 = por %p59, %p60
      %p62 = scmp.ne.s32.totalorder %s50, %s51
      %p63 = scmp.eq.s32.totalorder %s34, 3
      %p64 = por %p62, %p63
      %p66 = scmp.ne.s32.totalorder %s51, %s65
      %p67 = scmp.eq.s32.totalorder %s34, 0
      %p68 = por %p66, %p67
      %s69 = smul.u32 %s35, 2
      %s70 = sadd.s32 %s69, %s36
      %s71 = smul.u32 %s47, 2
      %s72 = sadd.s32 %s71, %s43
      %s73 = ssub.s32 %s70, %s72
      %p74 = scmp.eq.s32.totalorder %s73, 0
      %s76 = sadd.s32 %s75, 1
      %s77 = scalar_select %p74, %s75, %s76
      %p80 = pneg %p74
      %p81 = scmp.eq.s32.totalorder %s28, 3
      %p82 = por %p80, %p81
      %p83 = scmp.ne.s32.totalorder %s75, %s78
      %p84 = scmp.eq.s32.totalorder %s28, 0
      %p85 = por %p83, %p84
      %p86 = scmp.ne.s32.totalorder %s75, %s78
      %p87 = scmp.eq.s32.totalorder %s33, 3
      %p88 = por %p86, %p87
      %p89 = scmp.ne.s32.totalorder %s78, %s79
      %p90 = scmp.eq.s32.totalorder %s33, 0
      %p91 = por %p89, %p90
      %p92 = scmp.ne.s32.totalorder %s78, %s79
      %p93 = scmp.eq.s32.totalorder %s34, 3
      %p94 = por %p92, %p93
      %p96 = scmp.ne.s32.totalorder %s79, %s95
      %p97 = scmp.eq.s32.totalorder %s34, 0
      %p98 = por %p96, %p97
      %s100 = sadd.s32 %s99, 1
      %p103 = scmp.eq.s32.totalorder %s28, 3
      %p104 = scmp.ne.s32.totalorder %s99, %s101
      %p105 = scmp.eq.s32.totalorder %s28, 0
      %p106 = por %p104, %p105
      %p107 = scmp.ne.s32.totalorder %s99, %s101
      %p108 = scmp.eq.s32.totalorder %s33, 3
      %p109 = por %p107, %p108
      %p110 = scmp.ne.s32.totalorder %s101, %s102
      %p111 = scmp.eq.s32.totalorder %s33, 0
      %p112 = por %p110, %p111
      %p113 = scmp.ne.s32.totalorder %s101, %s102
      %p114 = scmp.eq.s32.totalorder %s34, 3
      %p115 = por %p113, %p114
      %p117 = scmp.ne.s32.totalorder %s102, %s116
      %p118 = scmp.eq.s32.totalorder %s34, 0
      %p119 = por %p117, %p118
      %s120 = smul.u32 %s35, 2
      %s121 = sadd.s32 %s120, %s36
      %s122 = smul.u32 %s47, 2
      %s123 = sadd.s32 %s122, %s43
      %s124 = ssub.s32 %s121, %s123
      %p125 = scmp.eq.s32.totalorder %s124, 0
      %s127 = sadd.s32 %s126, 1
      %s128 = scalar_select %p125, %s126, %s127
      %p131 = pneg %p125
      %p132 = scmp.eq.s32.totalorder %s28, 3
      %p133 = por %p131, %p132
      %p134 = scmp.ne.s32.totalorder %s126, %s129
      %p135 = scmp.eq.s32.totalorder %s28, 0
      %p136 = por %p134, %p135
      %p137 = scmp.ne.s32.totalorder %s126, %s129
      %p138 = scmp.eq.s32.totalorder %s33, 3
      %p139 = por %p137, %p138
      %p140 = scmp.ne.s32.totalorder %s129, %s130
      %p141 = scmp.eq.s32.totalorder %s33, 0
      %p142 = por %p140, %p141
      %p143 = scmp.ne.s32.totalorder %s129, %s130
      %p144 = scmp.eq.s32.totalorder %s34, 3
      %p145 = por %p143, %p144
      %p147 = scmp.ne.s32.totalorder %s130, %s146
      %p148 = scmp.eq.s32.totalorder %s34, 0
      %p149 = por %p147, %p148
      %s151 = sadd.s32 %s150, 1
      %p154 = scmp.eq.s32.totalorder %s28, 3
      %p155 = scmp.ne.s32.totalorder %s150, %s152
      %p156 = scmp.eq.s32.totalorder %s28, 0
      %p157 = por %p155, %p156
      %p158 = scmp.ne.s32.totalorder %s150, %s152
      %p159 = scmp.eq.s32.totalorder %s33, 3
      %p160 = por %p158, %p159
      %p161 = scmp.ne.s32.totalorder %s152, %s153
      %p162 = scmp.eq.s32.totalorder %s33, 0
      %p163 = por %p161, %p162
      %p164 = scmp.ne.s32.totalorder %s152, %s153
      %p165 = scmp.eq.s32.totalorder %s34, 3
      %p166 = por %p164, %p165
      %p168 = scmp.ne.s32.totalorder %s153, %s167
      %p169 = scmp.eq.s32.totalorder %s34, 0
      %p170 = por %p168, %p169
      %s172 = sadd.s32 %s171, 1
      %p175 = scmp.eq.s32.totalorder %s28, 3
      %p176 = scmp.ne.s32.totalorder %s171, %s173
      %p177 = scmp.eq.s32.totalorder %s28, 0
      %p178 = por %p176, %p177
      %p179 = scmp.ne.s32.totalorder %s171, %s173
      %p180 = scmp.eq.s32.totalorder %s33, 3
      %p181 = por %p179, %p180
      %p182 = scmp.ne.s32.totalorder %s173, %s174
      %p183 = scmp.eq.s32.totalorder %s33, 0
      %p184 = por %p182, %p183
      %p185 = scmp.ne.s32.totalorder %s173, %s174
      %p186 = scmp.eq.s32.totalorder %s34, 3
      %p187 = por %p185, %p186
      %p189 = scmp.ne.s32.totalorder %s174, %s188
      %p190 = scmp.eq.s32.totalorder %s34, 0
      %p191 = por %p189, %p190
      %s193 = sadd.s32 %s192, 1
      %p196 = scmp.eq.s32.totalorder %s28, 3
      %p197 = scmp.ne.s32.totalorder %s192, %s194
      %p198 = scmp.eq.s32.totalorder %s28, 0
      %p199 = por %p197, %p198
      %p200 = scmp.ne.s32.totalorder %s192, %s194
      %p201 = scmp.eq.s32.totalorder %s33, 3
      %p202 = por %p200, %p201
      %p203 = scmp.ne.s32.totalorder %s194, %s195
      %p204 = scmp.eq.s32.totalorder %s33, 0
      %p205 = por %p203, %p204
      %p206 = scmp.ne.s32.totalorder %s194, %s195
      %p207 = scmp.eq.s32.totalorder %s34, 3
      %p208 = por %p206, %p207
      %p210 = scmp.ne.s32.totalorder %s195, %s209
      %p211 = scmp.eq.s32.totalorder %s34, 0
      %p212 = por %p210, %p211
      %s214 = sadd.s32 %s213, 1
      %p217 = scmp.eq.s32.totalorder %s28, 3
      %p218 = scmp.ne.s32.totalorder %s213, %s215
      %p219 = scmp.eq.s32.totalorder %s28, 0
      %p220 = por %p218, %p219
      %p221 = scmp.ne.s32.totalorder %s213, %s215
      %p222 = scmp.eq.s32.totalorder %s33, 3
      %p223 = por %p221, %p222
      %p224 = scmp.ne.s32.totalorder %s215, %s216
      %p225 = scmp.eq.s32.totalorder %s33, 0
      %p226 = por %p224, %p225
      %p227 = scmp.ne.s32.totalorder %s215, %s216
      %p228 = scmp.eq.s32.totalorder %s34, 3
      %p229 = por %p227, %p228
      %p231 = scmp.ne.s32.totalorder %s216, %s230
      %p232 = scmp.eq.s32.totalorder %s34, 0
      %p233 = por %p231, %p232
      %s235 = sadd.s32 %s234, 1
      %p238 = scmp.eq.s32.totalorder %s28, 3
      %p239 = scmp.ne.s32.totalorder %s234, %s236
      %p240 = scmp.eq.s32.totalorder %s28, 0
      %p241 = por %p239, %p240
      %p242 = scmp.ne.s32.totalorder %s234, %s236
      %p243 = scmp.eq.s32.totalorder %s33, 3
      %p244 = por %p242, %p243
      %p245 = scmp.ne.s32.totalorder %s236, %s237
      %p246 = scmp.eq.s32.totalorder %s33, 0
      %p247 = por %p245, %p246
      %p248 = scmp.ne.s32.totalorder %s236, %s237
      %p249 = scmp.eq.s32.totalorder %s34, 3
      %p250 = por %p248, %p249
      %p252 = scmp.ne.s32.totalorder %s237, %s251
      %p253 = scmp.eq.s32.totalorder %s34, 0
      %p254 = por %p252, %p253
      %s255 = ssub.s32 %s35, %s47
      %p256 = scmp.eq.s32.totalorder %s255, 0
      %s258 = sadd.s32 %s257, 1
      %s259 = scalar_select %p256, %s257, %s258
      %p262 = pneg %p256
      %p263 = scmp.eq.s32.totalorder %s28, 3
      %p264 = por %p262, %p263
      %p265 = scmp.ne.s32.totalorder %s257, %s260
      %p266 = scmp.eq.s32.totalorder %s28, 0
      %p267 = por %p265, %p266
      %p268 = scmp.ne.s32.totalorder %s257, %s260
      %p269 = scmp.eq.s32.totalorder %s33, 3
      %p270 = por %p268, %p269
      %p271 = scmp.ne.s32.totalorder %s260, %s261
      %p272 = scmp.eq.s32.totalorder %s33, 0
      %p273 = por %p271, %p272
      %p274 = scmp.ne.s32.totalorder %s260, %s261
      %p275 = scmp.eq.s32.totalorder %s34, 3
      %p276 = por %p274, %p275
      %p278 = scmp.ne.s32.totalorder %s261, %s277
      %p279 = scmp.eq.s32.totalorder %s34, 0
      %p280 = por %p278, %p279
      %s281 = ssub.s32 %s35, %s47
      %p282 = scmp.eq.s32.totalorder %s281, 0
      %s284 = sadd.s32 %s283, 1
      %s285 = scalar_select %p282, %s283, %s284
      %p288 = pneg %p282
      %p289 = scmp.eq.s32.totalorder %s28, 3
      %p290 = por %p288, %p289
      %p291 = scmp.ne.s32.totalorder %s283, %s286
      %p292 = scmp.eq.s32.totalorder %s28, 0
      %p293 = por %p291, %p292
      %p294 = scmp.ne.s32.totalorder %s283, %s286
      %p295 = scmp.eq.s32.totalorder %s33, 3
      %p296 = por %p294, %p295
      %p297 = scmp.ne.s32.totalorder %s286, %s287
      %p298 = scmp.eq.s32.totalorder %s33, 0
      %p299 = por %p297, %p298
      %p300 = scmp.ne.s32.totalorder %s286, %s287
      %p301 = scmp.eq.s32.totalorder %s34, 3
      %p302 = por %p300, %p301
      %p304 = scmp.ne.s32.totalorder %s287, %s303
      %p305 = scmp.eq.s32.totalorder %s34, 0
      %p306 = por %p304, %p305
      %s307 = ssub.s32 %s35, %s47
      %p308 = scmp.eq.s32.totalorder %s307, 0
      %s310 = sadd.s32 %s309, 1
      %s311 = scalar_select %p308, %s309, %s310
      %p314 = pneg %p308
      %p315 = scmp.eq.s32.totalorder %s28, 3
      %p316 = por %p314, %p315
      %p317 = scmp.ne.s32.totalorder %s309, %s312
      %p318 = scmp.eq.s32.totalorder %s28, 0
      %p319 = por %p317, %p318
      %p320 = scmp.ne.s32.totalorder %s309, %s312
      %p321 = scmp.eq.s32.totalorder %s33, 3
      %p322 = por %p320, %p321
      %p323 = scmp.ne.s32.totalorder %s312, %s313
      %p324 = scmp.eq.s32.totalorder %s33, 0
      %p325 = por %p323, %p324
      %p326 = scmp.ne.s32.totalorder %s312, %s313
      %p327 = scmp.eq.s32.totalorder %s34, 3
      %p328 = por %p326, %p327
      %p330 = scmp.ne.s32.totalorder %s313, %s329
      %p331 = scmp.eq.s32.totalorder %s34, 0
      %p332 = por %p330, %p331
      %s333 = ssub.s32 %s35, %s47
      %p334 = scmp.eq.s32.totalorder %s333, 0
      %s336 = sadd.s32 %s335, 1
      %s337 = scalar_select %p334, %s335, %s336
      %p340 = pneg %p334
      %p341 = scmp.eq.s32.totalorder %s28, 3
      %p342 = por %p340, %p341
      %p343 = scmp.ne.s32.totalorder %s335, %s338
      %p344 = scmp.eq.s32.totalorder %s28, 0
      %p345 = por %p343, %p344
      %p346 = scmp.ne.s32.totalorder %s335, %s338
      %p347 = scmp.eq.s32.totalorder %s33, 3
      %p348 = por %p346, %p347
      %p349 = scmp.ne.s32.totalorder %s338, %s339
      %p350 = scmp.eq.s32.totalorder %s33, 0
      %p351 = por %p349, %p350
      %p352 = scmp.ne.s32.totalorder %s338, %s339
      %p353 = scmp.eq.s32.totalorder %s34, 3
      %p354 = por %p352, %p353
      %p356 = scmp.ne.s32.totalorder %s339, %s355
      %p357 = scmp.eq.s32.totalorder %s34, 0
      %p358 = por %p356, %p357
      %s359 = ssub.s32 %s35, %s47
      %p360 = scmp.eq.s32.totalorder %s359, 0
      %s362 = sadd.s32 %s361, 1
      %s363 = scalar_select %p360, %s361, %s362
      %p366 = pneg %p360
      %p367 = scmp.eq.s32.totalorder %s28, 3
      %p368 = por %p366, %p367
      %p369 = scmp.ne.s32.totalorder %s361, %s364
      %p370 = scmp.eq.s32.totalorder %s28, 0
      %p371 = por %p369, %p370
      %p372 = scmp.ne.s32.totalorder %s361, %s364
      %p373 = scmp.eq.s32.totalorder %s33, 3
      %p374 = por %p372, %p373
      %p375 = scmp.ne.s32.totalorder %s364, %s365
      %p376 = scmp.eq.s32.totalorder %s33, 0
      %p377 = por %p375, %p376
      %p378 = scmp.ne.s32.totalorder %s364, %s365
      %p379 = scmp.eq.s32.totalorder %s34, 3
      %p380 = por %p378, %p379
      %p382 = scmp.ne.s32.totalorder %s365, %s381
      %p383 = scmp.eq.s32.totalorder %s34, 0
      %p384 = por %p382, %p383
      %s385 = ssub.s32 %s35, %s47
      %p386 = scmp.eq.s32.totalorder %s385, 0
      %s388 = sadd.s32 %s387, 1
      %s389 = scalar_select %p386, %s387, %s388
      %p392 = pneg %p386
      %p393 = scmp.eq.s32.totalorder %s28, 3
      %p394 = por %p392, %p393
      %p395 = scmp.ne.s32.totalorder %s387, %s390
      %p396 = scmp.eq.s32.totalorder %s28, 0
      %p397 = por %p395, %p396
      %p398 = scmp.ne.s32.totalorder %s387, %s390
      %p399 = scmp.eq.s32.totalorder %s33, 3
      %p400 = por %p398, %p399
      %p401 = scmp.ne.s32.totalorder %s390, %s391
      %p402 = scmp.eq.s32.totalorder %s33, 0
      %p403 = por %p401, %p402
      %p404 = scmp.ne.s32.totalorder %s390, %s391
      %p405 = scmp.eq.s32.totalorder %s34, 3
      %p406 = por %p404, %p405
      %p408 = scmp.ne.s32.totalorder %s391, %s407
      %p409 = scmp.eq.s32.totalorder %s34, 0
      %p410 = por %p408, %p409
      %p411 = scmp.le.s32.totalorder 1, %s28
      %p412 = scmp.lt.s32.totalorder %s28, 5
      %p413 = pnand %p411, %p412
      %p414 = pneg %p413
      // Predicated region
      $region9: #{tpu_custom_call.1} parent=5 // pred_check
        _
      $region10: #{tpu_custom_call.1} parent=5 // pred_check_branch
        %416 = sbr.rel (%p413) target = $region12
      $region11: #{tpu_custom_call.1} parent=5 // pred_region
        %s417 = ssub.s32 %s28, 1
        // Predicated region
        $region13: #{tpu_custom_call.1} parent=11 // pred_check
          %p418 = pneg %p61
        $region14: #{tpu_custom_call.1} parent=11 // pred_check_branch
          %420 = sbr.rel (%p418) target = $region16
        $region15: #{tpu_custom_call.1} parent=11 // pred_region
          _
        $region16: #{tpu_custom_call.1} parent=11 // pred_fallthru
          _
        // Predicated region
        $region17: #{tpu_custom_call.1} parent=11 // pred_check
          %p421 = pneg %p112
        $region18: #{tpu_custom_call.1} parent=11 // pred_check_branch
          %423 = sbr.rel (%p421) target = $region20
        $region19: #{tpu_custom_call.1} parent=11 // pred_region
          _
        $region20: #{tpu_custom_call.1} parent=11 // pred_fallthru
          _
        // Predicated region
        $region21: #{tpu_custom_call.1} parent=11 // pred_check
          %p424 = pneg %p163
        $region22: #{tpu_custom_call.1} parent=11 // pred_check_branch
          %426 = sbr.rel (%p424) target = $region24
        $region23: #{tpu_custom_call.1} parent=11 // pred_region
          _
        $region24: #{tpu_custom_call.1} parent=11 // pred_fallthru
          _
        // Predicated region
        $region25: #{tpu_custom_call.1} parent=11 // pred_check
          %p427 = pneg %p184
        $region26: #{tpu_custom_call.1} parent=11 // pred_check_branch
          %429 = sbr.rel (%p427) target = $region28
        $region27: #{tpu_custom_call.1} parent=11 // pred_region
          _
        $region28: #{tpu_custom_call.1} parent=11 // pred_fallthru
          _
        // Predicated region
        $region29: #{tpu_custom_call.1} parent=11 // pred_check
          %p430 = pneg %p205
        $region30: #{tpu_custom_call.1} parent=11 // pred_check_branch
          %432 = sbr.rel (%p430) target = $region32
        $region31: #{tpu_custom_call.1} parent=11 // pred_region
          _
        $region32: #{tpu_custom_call.1} parent=11 // pred_fallthru
          _
        // Predicated region
        $region33: #{tpu_custom_call.1} parent=11 // pred_check
          %p433 = pneg %p226
        $region34: #{tpu_custom_call.1} parent=11 // pred_check_branch
          %435 = sbr.rel (%p433) target = $region36
        $region35: #{tpu_custom_call.1} parent=11 // pred_region
          _
        $region36: #{tpu_custom_call.1} parent=11 // pred_fallthru
          _
        // Predicated region
        $region37: #{tpu_custom_call.1} parent=11 // pred_check
          %p436 = pneg %p247
        $region38: #{tpu_custom_call.1} parent=11 // pred_check_branch
          %438 = sbr.rel (%p436) target = $region40
        $region39: #{tpu_custom_call.1} parent=11 // pred_region
          _
        $region40: #{tpu_custom_call.1} parent=11 // pred_fallthru
          _
      $region12: #{tpu_custom_call.1} parent=5 // pred_fallthru
        _
      %p439 = scmp.lt.s32.totalorder %s28, 4
      // Predicated region
      $region41: #{tpu_custom_call.1} parent=5 // pred_check
        %p440 = pneg %p439
      $region42: #{tpu_custom_call.1} parent=5 // pred_check_branch
        %442 = sbr.rel (%p440) target = $region44
      $region43: #{tpu_custom_call.1} parent=5 // pred_region
        // Predicated region
        $region45: #{tpu_custom_call.1} parent=43 // pred_check
          %p443 = pneg %p85
        $region46: #{tpu_custom_call.1} parent=43 // pred_check_branch
          %445 = sbr.rel (%p443) target = $region48
        $region47: #{tpu_custom_call.1} parent=43 // pred_region
          %s446 = smul.u32 %s35, 2
          %s447 = sadd.s32 %s446, %s36
          %p448 = scmp.lt.s32.totalorder %s447, 3
          %s449 = scalar_select %p448, %s447, 3
          %s450 = smul.addr %s449, 8
          %s451 = scalar_lea.vmem %s1, %s450
          %s452 = smul.u32 %s35, 2
          %s453 = sadd.s32 %s452, %s36
        $region48: #{tpu_custom_call.1} parent=43 // pred_fallthru
          _
        // Predicated region
        $region49: #{tpu_custom_call.1} parent=43 // pred_check
          %p454 = pneg %p136
        $region50: #{tpu_custom_call.1} parent=43 // pred_check_branch
          %456 = sbr.rel (%p454) target = $region52
        $region51: #{tpu_custom_call.1} parent=43 // pred_region
          %s457 = sand.u32 %s126, 1
          %s458 = sand.u32 %s126, 1
          %s459 = smul.addr %s458, 16
          %s460 = scalar_lea.vmem [#allocation6], %s459
          %s461 = smul.u32 %s35, 2
          %s462 = sadd.s32 %s461, %s36
          %s463 = smul.addr %s462, 4
          %s464 = scalar_lea.vmem %s3, %s463
          // Predicated region
          $region53: #{tpu_custom_call.1} parent=51 // pred_check
            _
          $region54: #{tpu_custom_call.1} parent=51 // pred_check_branch
            %466 = sbr.rel (0) target = $region56
          $region55: #{tpu_custom_call.1} parent=51 // pred_region
            // Predicated region
            $region57: #{tpu_custom_call.1} parent=55 // pred_check
              _
            $region58: #{tpu_custom_call.1} parent=55 // pred_check_branch
              %468 = sbr.rel target = $region60
            $region59: #{tpu_custom_call.1} parent=55 // pred_region
              // Predicated region
              $region72: #{tpu_custom_call.1} parent=59 // pred_check
                _
              $region73: #{tpu_custom_call.1} parent=59 // pred_check_branch
                %489 = sbr.rel (0) target = $region75
              $region74: #{tpu_custom_call.1} parent=59 // pred_region
                loop: start=0, step=1, limit=1
                $region76: #{tpu_custom_call.1} parent=74 // loop_pre_header
                  _
                $region77: #{tpu_custom_call.1} parent=74 // loop_header
                  %s491 = sphi 0, %s495
                  %p492 = scmp.ge.s32.totalorder %s491, 1
                  %s496 = sphi %s464, %s464
                  %s497 = sphi %s460, %s460
                $region78: #{tpu_custom_call.1} parent=74 // loop_header_branch
                  %494 = sbr.rel (%p492) target = $region82
                $region79: #{tpu_custom_call.1} parent=74 // loop_body
                  _
                $region80: #{tpu_custom_call.1} parent=74 // loop_footer
                  %s495 = sadd.s32 1, %s491
                $region81: #{tpu_custom_call.1} parent=74 // loop_footer_branch
                  %490 = sbr.rel target = $region77
                $region82: #{tpu_custom_call.1} parent=74 // loop_exit
                  _
                loop: start=0, step=1, limit=1
                $region83: #{tpu_custom_call.1} parent=74 // loop_pre_header
                  _
                $region84: #{tpu_custom_call.1} parent=74 // loop_header
                  %s500 = sphi 0, %s504
                  %p501 = scmp.ge.s32.totalorder %s500, 1
                  %s505 = sphi %s464, %s464
                  %s506 = sphi %s460, %s460
                $region85: #{tpu_custom_call.1} parent=74 // loop_header_branch
                  %503 = sbr.rel (%p501) target = $region89
                $region86: #{tpu_custom_call.1} parent=74 // loop_body
                  %v507 = vld [vmem:[%s505] sm:$0xf]
                  %508 = vst [vmem:[%s506] sm:$0xf] %v507
                  %v509 = vld [vmem:[%s505 + $0x10] sm:$0xf]
                  %510 = vst [vmem:[%s506 + $0x4] sm:$0xf] %v509
                  %v511 = vld [vmem:[%s505 + $0x20] sm:$0xf]
                  %512 = vst [vmem:[%s506 + $0x8] sm:$0xf] %v511
                  %v513 = vld [vmem:[%s505 + $0x30] sm:$0xf]
                  %514 = vst [vmem:[%s506 + $0xc] sm:$0xf] %v513
                $region87: #{tpu_custom_call.1} parent=74 // loop_footer
                  %s504 = sadd.s32 1, %s500
                $region88: #{tpu_custom_call.1} parent=74 // loop_footer_branch
                  %499 = sbr.rel target = $region84
                $region89: #{tpu_custom_call.1} parent=74 // loop_exit
                  _
              $region75: #{tpu_custom_call.1} parent=59 // pred_fallthru
                _
            $region60: #{tpu_custom_call.1} parent=55 // pred_fallthru
              _
            // Predicated region
            $region61: #{tpu_custom_call.1} parent=55 // pred_check
              _
            $region62: #{tpu_custom_call.1} parent=55 // pred_check_branch
              %470 = sbr.rel (0) target = $region64
            $region63: #{tpu_custom_call.1} parent=55 // pred_region
              loop: start=0, step=1, limit=1
              $region65: #{tpu_custom_call.1} parent=63 // loop_pre_header
                _
              $region66: #{tpu_custom_call.1} parent=63 // loop_header
                %s473 = sphi 0, %s477
                %p474 = scmp.ge.s32.totalorder %s473, 1
                %s478 = sphi %s464, %s464
                %s479 = sphi %s460, %s460
              $region67: #{tpu_custom_call.1} parent=63 // loop_header_branch
                %476 = sbr.rel (%p474) target = $region71
              $region68: #{tpu_custom_call.1} parent=63 // loop_body
                %v480 = vld [vmem:[%s478] sm:$0xf]
                %481 = vst [vmem:[%s479] sm:$0xf] %v480
                %v482 = vld [vmem:[%s478 + $0x10] sm:$0xf]
                %483 = vst [vmem:[%s479 + $0x4] sm:$0xf] %v482
                %v484 = vld [vmem:[%s478 + $0x20] sm:$0xf]
                %485 = vst [vmem:[%s479 + $0x8] sm:$0xf] %v484
                %v486 = vld [vmem:[%s478 + $0x30] sm:$0xf]
                %487 = vst [vmem:[%s479 + $0xc] sm:$0xf] %v486
              $region69: #{tpu_custom_call.1} parent=63 // loop_footer
                %s477 = sadd.s32 1, %s473
              $region70: #{tpu_custom_call.1} parent=63 // loop_footer_branch
                %472 = sbr.rel target = $region66
              $region71: #{tpu_custom_call.1} parent=63 // loop_exit
                _
            $region64: #{tpu_custom_call.1} parent=55 // pred_fallthru
              _
          $region56: #{tpu_custom_call.1} parent=51 // pred_fallthru
            _
          %515 = vnop
        $region52: #{tpu_custom_call.1} parent=43 // pred_fallthru
          _
      $region44: #{tpu_custom_call.1} parent=5 // pred_fallthru
        _
      %p516 = scmp.le.s32.totalorder 1, %s28
      %p517 = scmp.lt.s32.totalorder %s28, 5
      %p518 = pnand %p516, %p517
      %p519 = pneg %p518
      // Predicated region
      $region90: #{tpu_custom_call.1} parent=5 // pred_check
        _
      $region91: #{tpu_custom_call.1} parent=5 // pred_check_branch
        %521 = sbr.rel (%p518) target = $region93
      $region92: #{tpu_custom_call.1} parent=5 // pred_region
        %s522 = ssub.s32 %s28, 1
        %s523 = sand.u32 %s129, 1
        %s524 = sand.u32 %s129, 1
        %s525 = smul.addr %s524, 16
        %s526 = scalar_lea.vmem [#allocation6], %s525
        // Predicated region
        $region94: #{tpu_custom_call.1} parent=92 // pred_check
          %p527 = pneg %p142
        $region95: #{tpu_custom_call.1} parent=92 // pred_check_branch
          %529 = sbr.rel (%p527) target = $region97
        $region96: #{tpu_custom_call.1} parent=92 // pred_region
          _
        $region97: #{tpu_custom_call.1} parent=92 // pred_fallthru
          _
        %p530 = pneg %p61
        %p531 = pneg %p58
        %s532 = smul.u32 %s37, 2
        %s533 = sadd.s32 %s532, %s38
        %p534 = scmp.lt.s32.totalorder %s533, 3
        %s535 = scalar_select %p534, %s533, 3
        %s536 = smul.addr %s535, 8
        %s537 = scalar_lea.vmem %s1, %s536
        %p538 = pneg %p91
        %p539 = pneg %p88
        %p540 = pneg %p112
        %p541 = pneg %p109
        %s542 = sand.u32 %s129, 1
        %s543 = sand.u32 %s129, 1
        %s544 = smul.addr %s543, 16
        %s545 = scalar_lea.vmem [#allocation6], %s544
        %p546 = pneg %p142
        %p547 = pneg %p139
        %p548 = pneg %p163
        %p549 = pneg %p160
        %p550 = pneg %p184
        %p551 = pneg %p181
        %p552 = pneg %p205
        %p553 = pneg %p202
        %p554 = pneg %p226
        %p555 = pneg %p223
        %p556 = pneg %p247
        %p557 = pneg %p244
        %p558 = pneg %p273
        %p559 = pneg %p270
        %s560 = sand.u32 %s260, 1
        %s561 = scalar_lea.sflag [#allocation8], %s560
        %s562 = sand.u32 %s260, 1
        %s563 = scalar_lea.vmem [#allocation7], %s562
        %p564 = pneg %p299
        %p565 = pneg %p296
        %s566 = sand.u32 %s33, 1
        %s567 = scalar_lea.sflag [#allocation10], %s566
        %s568 = sand.u32 %s286, 1
        %s569 = scalar_lea.vmem [#allocation9], %s568
        %p570 = pneg %p325
        %p571 = pneg %p322
        %s572 = sand.u32 %s33, 1
        %s573 = scalar_lea.sflag [#allocation10], %s572
        %s574 = sand.u32 %s312, 1
        %s575 = scalar_lea.vmem [#allocation11], %s574
        %p576 = pneg %p351
        %p577 = pneg %p348
        %p578 = scmp.lt.s32.totalorder %s37, 1
        %s579 = scalar_select %p578, %s37, 1
        %s580 = scalar_lea.vmem %s12, %s579
        %p581 = pneg %p377
        %p582 = pneg %p374
        %p583 = scmp.lt.s32.totalorder %s37, 1
        %s584 = scalar_select %p583, %s37, 1
        %s585 = scalar_lea.vmem %s13, %s584
        %p586 = pneg %p403
        %p587 = pneg %p400
        %p588 = scmp.lt.s32.totalorder %s37, 1
        %s589 = scalar_select %p588, %s37, 1
        %s590 = scalar_lea.vmem %s14, %s589
        %s591 = smul.u32 %s37, 2
        %s592 = sadd.s32 %s591, %s38
        %p593 = scmp.lt.s32.totalorder %s592, 3
        %s594 = scalar_select %p593, %s592, 3
        %s595 = smul.addr %s594, 8
        %s596 = scalar_lea.vmem %s1, %s595
        %s597 = smul.u32 %s37, 2
        %s598 = sadd.s32 %s597, %s38
        %s599 = smul.u32 %s37, 2
        %s600 = sadd.s32 %s599, %s38
        %p601 = scmp.lt.s32.totalorder %s37, 1
        %s602 = scalar_select %p601, %s37, 1
        %s603 = scalar_lea.vmem %s12, %s602
        %p604 = scmp.lt.s32.totalorder %s37, 1
        %s605 = scalar_select %p604, %s37, 1
        %s606 = scalar_lea.vmem %s13, %s605
        %p607 = scmp.lt.s32.totalorder %s37, 1
        %s608 = scalar_select %p607, %s37, 1
        %s609 = scalar_lea.vmem %s14, %s608
        %p611 = scmp.eq.s32.totalorder %s38, 0
        // Predicated region
        $region98: #{tpu_custom_call.1} parent=92 // pred_check
          %p612 = pneg %p611
        $region99: #{tpu_custom_call.1} parent=92 // pred_check_branch
          %614 = sbr.rel (%p612) target = $region101
        $region100: #{tpu_custom_call.1} parent=92 // pred_region
          %s615 = sld [smem:[#allocation5]]
          %s616 = smax.f32 %s615, 0.001
          %s617 = smin.f32 %s616, 0.5
          %v618 = vstv %s617
          %v619 = vrcp.pop %v618
          %s620 = vtos %v619
          %v621 = vld [vmem:[%s7] sm:$0xf]
          %v622 = vld [vmem:[%s7 + $0x4] sm:$0xf]
          %v623 = vld [vmem:[%s7 + $0x8] sm:$0xf]
          %v624 = vld [vmem:[%s7 + $0xc] sm:$0xf]
          %v625 = vld [vmem:[%s7 + $0x10] sm:$0xf]
          %v626 = vld [vmem:[%s7 + $0x14] sm:$0xf]
          %v627 = vld [vmem:[%s7 + $0x18] sm:$0xf]
          %v628 = vld [vmem:[%s7 + $0x1c] sm:$0xf]
          %v629 = vld [vmem:[%s7 + $0x20] sm:$0xf]
          %v630 = vld [vmem:[%s7 + $0x24] sm:$0xf]
          %v631 = vld [vmem:[%s7 + $0x28] sm:$0xf]
          %v632 = vld [vmem:[%s7 + $0x2c] sm:$0xf]
          %v633 = vld [vmem:[%s7 + $0x30] sm:$0xf]
          %v634 = vld [vmem:[%s7 + $0x34] sm:$0xf]
          %v635 = vld [vmem:[%s7 + $0x38] sm:$0xf]
          %v636 = vld [vmem:[%s7 + $0x3c] sm:$0xf]
          %v637 = vld [vmem:[%s4] sm:$0xf]
          %v638 = vld [vmem:[%s4 + $0x4] sm:$0xf]
          %v639 = vld [vmem:[%s4 + $0x8] sm:$0xf]
          %v640 = vld [vmem:[%s4 + $0xc] sm:$0xf]
          %v641 = vld [vmem:[%s4 + $0x10] sm:$0xf]
          %v642 = vld [vmem:[%s4 + $0x14] sm:$0xf]
          %v643 = vld [vmem:[%s4 + $0x18] sm:$0xf]
          %v644 = vld [vmem:[%s4 + $0x1c] sm:$0xf]
          %v645 = vld [vmem:[%s4 + $0x20] sm:$0xf]
          %v646 = vld [vmem:[%s4 + $0x24] sm:$0xf]
          %v647 = vld [vmem:[%s4 + $0x28] sm:$0xf]
          %v648 = vld [vmem:[%s4 + $0x2c] sm:$0xf]
          %v649 = vld [vmem:[%s4 + $0x30] sm:$0xf]
          %v650 = vld [vmem:[%s4 + $0x34] sm:$0xf]
          %v651 = vld [vmem:[%s4 + $0x38] sm:$0xf]
          %v652 = vld [vmem:[%s4 + $0x3c] sm:$0xf]
          %v653 = vld [vmem:[%s8] sm:$0xff]
          %v654 = vld [vmem:[%s8 + $0x8] sm:$0xff]
          %v655 = vld [vmem:[%s8 + $0x10] sm:$0xff]
          %v656 = vld [vmem:[%s8 + $0x18] sm:$0xff]
          %v657 = vld [vmem:[%s8 + $0x20] sm:$0xff]
          %v658 = vld [vmem:[%s8 + $0x28] sm:$0xff]
          %v659 = vld [vmem:[%s8 + $0x30] sm:$0xff]
          %v660 = vld [vmem:[%s8 + $0x38] sm:$0xff]
          %v661 = vld [vmem:[%s8 + $0x40] sm:$0xff]
          %v662 = vld [vmem:[%s8 + $0x48] sm:$0xff]
          %v663 = vld [vmem:[%s8 + $0x50] sm:$0xff]
          %v664 = vld [vmem:[%s8 + $0x58] sm:$0xff]
          %v665 = vld [vmem:[%s8 + $0x60] sm:$0xff]
          %v666 = vld [vmem:[%s8 + $0x68] sm:$0xff]
          %v667 = vld [vmem:[%s8 + $0x70] sm:$0xff]
          %v668 = vld [vmem:[%s8 + $0x78] sm:$0xff]
          %670 = vset.pattern.permute.xlu0 0
          %671 = vperm.xlu0 %670, %v653
          %v672 = vpop.permute.xlu0 %671
          %675 = vset.pattern.permute.xlu0 0
          %676 = vperm.xlu0 %675, %v654
          %v677 = vpop.permute.xlu0 %676
          %680 = vset.pattern.permute.xlu0 0
          %681 = vperm.xlu0 %680, %v655
          %v682 = vpop.permute.xlu0 %681
          %685 = vset.pattern.permute.xlu0 0
          %686 = vperm.xlu0 %685, %v656
          %v687 = vpop.permute.xlu0 %686
          %690 = vset.pattern.permute.xlu0 0
          %691 = vperm.xlu0 %690, %v657
          %v692 = vpop.permute.xlu0 %691
          %695 = vset.pattern.permute.xlu0 0
          %696 = vperm.xlu0 %695, %v658
          %v697 = vpop.permute.xlu0 %696
          %700 = vset.pattern.permute.xlu0 0
          %701 = vperm.xlu0 %700, %v659
          %v702 = vpop.permute.xlu0 %701
          %705 = vset.pattern.permute.xlu0 0
          %706 = vperm.xlu0 %705, %v660
          %v707 = vpop.permute.xlu0 %706
          %710 = vset.pattern.permute.xlu0 0
          %711 = vperm.xlu0 %710, %v661
          %v712 = vpop.permute.xlu0 %711
          %715 = vset.pattern.permute.xlu0 0
          %716 = vperm.xlu0 %715, %v662
          %v717 = vpop.permute.xlu0 %716
          %720 = vset.pattern.permute.xlu0 0
          %721 = vperm.xlu0 %720, %v663
          %v722 = vpop.permute.xlu0 %721
          %725 = vset.pattern.permute.xlu0 0
          %726 = vperm.xlu0 %725, %v664
          %v727 = vpop.permute.xlu0 %726
          %730 = vset.pattern.permute.xlu0 0
          %731 = vperm.xlu0 %730, %v665
          %v732 = vpop.permute.xlu0 %731
          %735 = vset.pattern.permute.xlu0 0
          %736 = vperm.xlu0 %735, %v666
          %v737 = vpop.permute.xlu0 %736
          %740 = vset.pattern.permute.xlu0 0
          %741 = vperm.xlu0 %740, %v667
          %v742 = vpop.permute.xlu0 %741
          %745 = vset.pattern.permute.xlu0 0
          %746 = vperm.xlu0 %745, %v668
          %v747 = vpop.permute.xlu0 %746
          %v765 = vunpack.c.l.b16 %v621
          %v766 = vunpack.c.l.b16 %v622
          %v767 = vunpack.c.l.b16 %v623
          %v768 = vunpack.c.l.b16 %v624
          %v769 = vunpack.c.l.b16 %v625
          %v770 = vunpack.c.l.b16 %v626
          %v771 = vunpack.c.l.b16 %v627
          %v772 = vunpack.c.l.b16 %v628
          %v773 = vunpack.c.l.b16 %v629
          %v774 = vunpack.c.l.b16 %v630
          %v775 = vunpack.c.l.b16 %v631
          %v776 = vunpack.c.l.b16 %v632
          %v777 = vunpack.c.l.b16 %v633
          %v778 = vunpack.c.l.b16 %v634
          %v779 = vunpack.c.l.b16 %v635
          %v780 = vunpack.c.l.b16 %v636
          %v781 = vpack.c.b16 %v766, %v765
          %v782 = vpack.c.b16 %v768, %v767
          %v783 = vpack.c.b16 %v770, %v769
          %v784 = vpack.c.b16 %v772, %v771
          %v785 = vpack.c.b16 %v774, %v773
          %v786 = vpack.c.b16 %v776, %v775
          %v787 = vpack.c.b16 %v778, %v777
          %v788 = vpack.c.b16 %v780, %v779
          %v813 = vunpack.c.l.b16 %v637
          %v814 = vunpack.c.l.b16 %v638
          %v815 = vunpack.c.l.b16 %v639
          %v816 = vunpack.c.l.b16 %v640
          %v817 = vunpack.c.l.b16 %v641
          %v818 = vunpack.c.l.b16 %v642
          %v819 = vunpack.c.l.b16 %v643
          %v820 = vunpack.c.l.b16 %v644
          %v821 = vunpack.c.l.b16 %v645
          %v822 = vunpack.c.l.b16 %v646
          %v823 = vunpack.c.l.b16 %v647
          %v824 = vunpack.c.l.b16 %v648
          %v825 = vunpack.c.l.b16 %v649
          %v826 = vunpack.c.l.b16 %v650
          %v827 = vunpack.c.l.b16 %v651
          %v828 = vunpack.c.l.b16 %v652
          %v829 = vpack.c.b16 %v814, %v813
          %v830 = vpack.c.b16 %v816, %v815
          %v831 = vpack.c.b16 %v818, %v817
          %v832 = vpack.c.b16 %v820, %v819
          %v833 = vpack.c.b16 %v822, %v821
          %v834 = vpack.c.b16 %v824, %v823
          %v835 = vpack.c.b16 %v826, %v825
          %v836 = vpack.c.b16 %v828, %v827
          %845 = vmatprep.subr.bf16.mxu0 0
          %846 = vmatpush1.bf16.msra.mxu0 %v829
          %847 = vmatprep.subr.bf16.mxu0 0
          %848 = vmatpush1.bf16.msra.mxu0 %v830
          %849 = vmatprep.subr.bf16.mxu0 0
          %850 = vmatpush1.bf16.msra.mxu0 %v831
          %851 = vmatprep.subr.bf16.mxu0 0
          %852 = vmatpush1.bf16.msra.mxu0 %v832
          %853 = vmatprep.subr.bf16.mxu0 0
          %854 = vmatpush1.bf16.msra.mxu0 %v833
          %855 = vmatprep.subr.bf16.mxu0 0
          %856 = vmatpush1.bf16.msra.mxu0 %v834
          %857 = vmatprep.subr.bf16.mxu0 0
          %858 = vmatpush1.bf16.msra.mxu0 %v835
          %859 = vmatprep.subr.bf16.mxu0 0
          %860 = vmatpush1.bf16.msra.mxu0 %v836
          %861 = vmatprep.subr.bf16.mxu0 0
          %862 = vmatpush1.bf16.msra.mxu0 0
          %863 = vmatprep.subr.bf16.mxu0 0
          %864 = vmatpush1.bf16.msra.mxu0 0
          %865 = vmatprep.subr.bf16.mxu0 0
          %866 = vmatpush1.bf16.msra.mxu0 0
          %867 = vmatprep.subr.bf16.mxu0 0
          %868 = vmatpush1.bf16.msra.mxu0 0
          %869 = vmatprep.subr.bf16.mxu0 0
          %870 = vmatpush1.bf16.msra.mxu0 0
          %871 = vmatprep.subr.bf16.mxu0 0
          %872 = vmatpush1.bf16.msra.mxu0 0
          %873 = vmatprep.subr.bf16.mxu0 0
          %874 = vmatpush1.bf16.msra.mxu0 0
          %875 = vmatprep.subr.bf16.mxu0 0
          %876 = vmatpush1.bf16.msra.mxu0 0
          %877 = vmatprep.mubr.bf16.mxu0 0
          %878 = vmatmul.mubr.bf16.gmra.mrb[0].mxu0 %v781
          %v879 = vpop.f32.mrb[0].mxu0
          %v880 = vadd.f32 %v672, %v879
          %v881 = vpop.f32.mrb[0].mxu0
          %v882 = vpop.f32.mrb[0].mxu0
          %v883 = vadd.f32 %v677, %v882
          %v884 = vpop.f32.mrb[0].mxu0
          %885 = vmatprep.mubr.bf16.mxu0 0
          %886 = vmatmul.mubr.bf16.gmra.mrb[0].mxu0 %v782
          %v887 = vpop.f32.mrb[0].mxu0
          %v888 = vadd.f32 %v682, %v887
          %v889 = vpop.f32.mrb[0].mxu0
          %v890 = vpop.f32.mrb[0].mxu0
          %v891 = vadd.f32 %v687, %v890
          %v892 = vpop.f32.mrb[0].mxu0
          %893 = vmatprep.mubr.bf16.mxu0 0
          %894 = vmatmul.mubr.bf16.gmra.mrb[0].mxu0 %v783
          %v895 = vpop.f32.mrb[0].mxu0
          %v896 = vadd.f32 %v692, %v895
          %v897 = vpop.f32.mrb[0].mxu0
          %v898 = vpop.f32.mrb[0].mxu0
          %v899 = vadd.f32 %v697, %v898
          %v900 = vpop.f32.mrb[0].mxu0
          %901 = vmatprep.mubr.bf16.mxu0 0
          %902 = vmatmul.mubr.bf16.gmra.mrb[0].mxu0 %v784
          %v903 = vpop.f32.mrb[0].mxu0
          %v904 = vadd.f32 %v702, %v903
          %v905 = vpop.f32.mrb[0].mxu0
          %v906 = vpop.f32.mrb[0].mxu0
          %v907 = vadd.f32 %v707, %v906
          %v908 = vpop.f32.mrb[0].mxu0
          %909 = vmatprep.mubr.bf16.mxu0 0
          %910 = vmatmul.mubr.bf16.gmra.mrb[0].mxu0 %v785
          %v911 = vpop.f32.mrb[0].mxu0
          %v912 = vadd.f32 %v712, %v911
          %v913 = vpop.f32.mrb[0].mxu0
          %v914 = vpop.f32.mrb[0].mxu0
          %v915 = vadd.f32 %v717, %v914
          %v916 = vpop.f32.mrb[0].mxu0
          %917 = vmatprep.mubr.bf16.mxu0 0
          %918 = vmatmul.mubr.bf16.gmra.mrb[0].mxu0 %v786
          %v919 = vpop.f32.mrb[0].mxu0
          %v920 = vadd.f32 %v722, %v919
          %v921 = vpop.f32.mrb[0].mxu0
          %v922 = vpop.f32.mrb[0].mxu0
          %v923 = vadd.f32 %v727, %v922
          %v924 = vpop.f32.mrb[0].mxu0
          %925 = vmatprep.mubr.bf16.mxu0 0
          %926 = vmatmul.mubr.bf16.gmra.mrb[0].mxu0 %v787
          %v927 = vpop.f32.mrb[0].mxu0
          %v928 = vadd.f32 %v732, %v927
          %v929 = vpop.f32.mrb[0].mxu0
          %v930 = vpop.f32.mrb[0].mxu0
          %v931 = vadd.f32 %v737, %v930
          %v932 = vpop.f32.mrb[0].mxu0
          %933 = vmatprep.mubr.bf16.mxu0 0
          %934 = vmatmul.mubr.bf16.gmra.mrb[0].mxu0 %v788
          %v935 = vpop.f32.mrb[0].mxu0
          %v936 = vadd.f32 %v742, %v935
          %v937 = vpop.f32.mrb[0].mxu0
          %v938 = vpop.f32.mrb[0].mxu0
          %v939 = vadd.f32 %v747, %v938
          %v940 = vpop.f32.mrb[0].mxu0
          %941 = vdwg.mxu0
          %v942 = vmul.f32 %v880, %v880
          %v943 = vmul.f32 %v883, %v883
          %v944 = vmul.f32 %v888, %v888
          %v945 = vmul.f32 %v891, %v891
          %v946 = vmul.f32 %v896, %v896
          %v947 = vmul.f32 %v899, %v899
          %v948 = vmul.f32 %v904, %v904
          %v949 = vmul.f32 %v907, %v907
          %v950 = vmul.f32 %v912, %v912
          %v951 = vmul.f32 %v915, %v915
          %v952 = vmul.f32 %v920, %v920
          %v953 = vmul.f32 %v923, %v923
          %v954 = vmul.f32 %v928, %v928
          %v955 = vmul.f32 %v931, %v931
          %v956 = vmul.f32 %v936, %v936
          %v957 = vmul.f32 %v939, %v939
          %vm958 = vcmask 261120
          %v959 = vsel %vm958, %v942, 0.0
          %v960 = vsel %vm958, %v943, 0.0
          %v961 = vadd.f32 %v959, %v960
          %v962 = vsel %vm958, %v944, 0.0
          %v963 = vadd.f32 %v961, %v962
          %v964 = vsel %vm958, %v945, 0.0
          %v965 = vadd.f32 %v963, %v964
          %v966 = vsel %vm958, %v946, 0.0
          %v967 = vadd.f32 %v965, %v966
          %v968 = vsel %vm958, %v947, 0.0
          %v969 = vadd.f32 %v967, %v968
          %v970 = vsel %vm958, %v948, 0.0
          %v971 = vadd.f32 %v969, %v970
          %v972 = vsel %vm958, %v949, 0.0
          %v973 = vadd.f32 %v971, %v972
          %v974 = vsel %vm958, %v950, 0.0
          %v975 = vadd.f32 %v973, %v974
          %v976 = vsel %vm958, %v951, 0.0
          %v977 = vadd.f32 %v975, %v976
          %v978 = vsel %vm958, %v952, 0.0
          %v979 = vadd.f32 %v977, %v978
          %v980 = vsel %vm958, %v953, 0.0
          %v981 = vadd.f32 %v979, %v980
          %v982 = vsel %vm958, %v954, 0.0
          %v983 = vadd.f32 %v981, %v982
          %v984 = vsel %vm958, %v955, 0.0
          %v985 = vadd.f32 %v983, %v984
          %v986 = vsel %vm958, %v956, 0.0
          %v987 = vadd.f32 %v985, %v986
          %v988 = vsel %vm958, %v957, 0.0
          %v989 = vadd.f32 %v987, %v988
          %v990 = vrot.slane %v989, 4
          %v991 = vadd.f32 %v989, %v990
          %v992 = vrot.slane %v991, 2
          %v993 = vadd.f32 %v991, %v992
          %v994 = vrot.slane %v993, 1
          %v995 = vadd.f32 %v993, %v994
          %v996 = vmax.f32 %v995, 1e-24
          %v997 = vrsqrt.pop %v996
          %v998 = vstv %s620
          %v999 = vmul.f32 %v997, %v998
          %v1000 = vmul.f32 %v880, %v999
          %v1001 = vmul.f32 %v883, %v999
          %v1002 = vmul.f32 %v888, %v999
          %v1003 = vmul.f32 %v891, %v999
          %v1004 = vmul.f32 %v896, %v999
          %v1005 = vmul.f32 %v899, %v999
          %v1006 = vmul.f32 %v904, %v999
          %v1007 = vmul.f32 %v907, %v999
          %v1008 = vmul.f32 %v912, %v999
          %v1009 = vmul.f32 %v915, %v999
          %v1010 = vmul.f32 %v920, %v999
          %v1011 = vmul.f32 %v923, %v999
          %v1012 = vmul.f32 %v928, %v999
          %v1013 = vmul.f32 %v931, %v999
          %v1014 = vmul.f32 %v936, %v999
          %v1015 = vmul.f32 %v939, %v999
          %v1016 = vpack.c.bf16 %v1001, %v1000
          %v1017 = vpack.c.bf16 %v1003, %v1002
          %v1018 = vpack.c.bf16 %v1005, %v1004
          %v1019 = vpack.c.bf16 %v1007, %v1006
          %v1020 = vpack.c.bf16 %v1009, %v1008
          %v1021 = vpack.c.bf16 %v1011, %v1010
          %v1022 = vpack.c.bf16 %v1013, %v1012
          %v1023 = vpack.c.bf16 %v1015, %v1014
          %1024 = vst.msk [vmem:[#allocation2] sm:$0xff] %vm958, %v1016
          %1025 = vst.msk [vmem:[#allocation2 + $0x8] sm:$0xff] %vm958, %v1017
          %1026 = vst.msk [vmem:[#allocation2 + $0x10] sm:$0xff] %vm958, %v1018
          %1027 = vst.msk [vmem:[#allocation2 + $0x18] sm:$0xff] %vm958, %v1019
          %1028 = vst.msk [vmem:[#allocation2 + $0x20] sm:$0xff] %vm958, %v1020
          %1029 = vst.msk [vmem:[#allocation2 + $0x28] sm:$0xff] %vm958, %v1021
          %1030 = vst.msk [vmem:[#allocation2 + $0x30] sm:$0xff] %vm958, %v1022
          %1031 = vst.msk [vmem:[#allocation2 + $0x38] sm:$0xff] %vm958, %v1023
          %v1032 = vlaneseq
          %v1033 = vand.u32 %v1032, 127
          %vm1034 = vcmask 253952
          %1035 = vst.msk [vmem:[#allocation3] sm:$0x1] %vm1034, %v1033
          %v1036 = vlaneseq
          %v1037 = vshrl.u32 %v1036, 7
          %vm1038 = vcmask 7168
          %1039 = vst.msk [vmem:[#allocation4] sm:$0xff] %vm1038, %v1037
          %1040 = vst.msk [vmem:[%s563] sm:$0x1] %vm1034, -inf
          %1041 = vst.msk [vmem:[%s569] sm:$0x1] %vm1034, 0.0
          %1042 = vst.msk [vmem:[%s575] sm:$0x1] %vm1034, 0
          %vm1043 = vcmask 0
          %1044 = vst.msk [vmem:[%s603] sm:$0x1] %vm1043, 0.0
          %1045 = vst.msk [vmem:[%s606] sm:$0x1] %vm1043, 0.0
          %1046 = vst.msk [vmem:[%s609] sm:$0x1] %vm1043, 0.0
        $region101: #{tpu_custom_call.1} parent=92 // pred_fallthru
          _
        %s1047 = smul.u32 %s37, 2
        %s1048 = sadd.s32 %s1047, %s38
        %s1049 = smul.u32 %s1048, 8
        %v1050 = vld [vmem:[%s526] sm:$0xf]
        %v1051 = vld [vmem:[%s5] sm:$0xf]
        %v1052 = vld [vmem:[%s5 + $0x4] sm:$0xf]
        %v1053 = vld [vmem:[%s5 + $0x8] sm:$0xf]
        %v1054 = vld [vmem:[%s5 + $0xc] sm:$0xf]
        %v1055 = vld [vmem:[%s5 + $0x10] sm:$0xf]
        %v1056 = vld [vmem:[%s5 + $0x14] sm:$0xf]
        %v1057 = vld [vmem:[%s5 + $0x18] sm:$0xf]
        %v1058 = vld [vmem:[%s5 + $0x1c] sm:$0xf]
        %v1059 = vld [vmem:[%s5 + $0x20] sm:$0xf]
        %v1060 = vld [vmem:[%s5 + $0x24] sm:$0xf]
        %v1061 = vld [vmem:[%s5 + $0x28] sm:$0xf]
        %v1062 = vld [vmem:[%s5 + $0x2c] sm:$0xf]
        %v1063 = vld [vmem:[%s5 + $0x30] sm:$0xf]
        %v1064 = vld [vmem:[%s5 + $0x34] sm:$0xf]
        %v1065 = vld [vmem:[%s5 + $0x38] sm:$0xf]
        %v1066 = vld [vmem:[%s5 + $0x3c] sm:$0xf]
        %v1067 = vld [vmem:[%s6] sm:$0x1]
        %v1069 = vlaneseq
        %v1070 = vshrl.u32 %v1069, 7
        %v1071 = vsub.s32 0, %v1070
        %v1072 = vrot.slane %v1067, %v1071
        %v1090 = vunpack.c.l.b16 %v1051
        %v1091 = vunpack.c.l.b16 %v1052
        %v1092 = vunpack.c.l.b16 %v1053
        %v1093 = vunpack.c.l.b16 %v1054
        %v1094 = vunpack.c.l.b16 %v1055
        %v1095 = vunpack.c.l.b16 %v1056
        %v1096 = vunpack.c.l.b16 %v1057
        %v1097 = vunpack.c.l.b16 %v1058
        %v1098 = vunpack.c.l.b16 %v1059
        %v1099 = vunpack.c.l.b16 %v1060
        %v1100 = vunpack.c.l.b16 %v1061
        %v1101 = vunpack.c.l.b16 %v1062
        %v1102 = vunpack.c.l.b16 %v1063
        %v1103 = vunpack.c.l.b16 %v1064
        %v1104 = vunpack.c.l.b16 %v1065
        %v1105 = vunpack.c.l.b16 %v1066
        %v1106 = vpack.c.b16 %v1091, %v1090
        %v1107 = vpack.c.b16 %v1093, %v1092
        %v1108 = vpack.c.b16 %v1095, %v1094
        %v1109 = vpack.c.b16 %v1097, %v1096
        %v1110 = vpack.c.b16 %v1099, %v1098
        %v1111 = vpack.c.b16 %v1101, %v1100
        %v1112 = vpack.c.b16 %v1103, %v1102
        %v1113 = vpack.c.b16 %v1105, %v1104
        %1122 = vmatprep.subr.bf16.mxu0 0
        %1123 = vmatpush1.bf16.msra.mxu0 %v1106
        %1124 = vmatprep.subr.bf16.mxu0 0
        %1125 = vmatpush1.bf16.msra.mxu0 %v1107
        %1126 = vmatprep.subr.bf16.mxu0 0
        %1127 = vmatpush1.bf16.msra.mxu0 %v1108
        %1128 = vmatprep.subr.bf16.mxu0 0
        %1129 = vmatpush1.bf16.msra.mxu0 %v1109
        %1130 = vmatprep.subr.bf16.mxu0 0
        %1131 = vmatpush1.bf16.msra.mxu0 %v1110
        %1132 = vmatprep.subr.bf16.mxu0 0
        %1133 = vmatpush1.bf16.msra.mxu0 %v1111
        %1134 = vmatprep.subr.bf16.mxu0 0
        %1135 = vmatpush1.bf16.msra.mxu0 %v1112
        %1136 = vmatprep.subr.bf16.mxu0 0
        %1137 = vmatpush1.bf16.msra.mxu0 %v1113
        %1138 = vmatprep.subr.bf16.mxu0 0
        %1139 = vmatpush1.bf16.msra.mxu0 0
        %1140 = vmatprep.subr.bf16.mxu0 0
        %1141 = vmatpush1.bf16.msra.mxu0 0
        %1142 = vmatprep.subr.bf16.mxu0 0
        %1143 = vmatpush1.bf16.msra.mxu0 0
        %1144 = vmatprep.subr.bf16.mxu0 0
        %1145 = vmatpush1.bf16.msra.mxu0 0
        %1146 = vmatprep.subr.bf16.mxu0 0
        %1147 = vmatpush1.bf16.msra.mxu0 0
        %1148 = vmatprep.subr.bf16.mxu0 0
        %1149 = vmatpush1.bf16.msra.mxu0 0
        %1150 = vmatprep.subr.bf16.mxu0 0
        %1151 = vmatpush1.bf16.msra.mxu0 0
        %1152 = vmatprep.subr.bf16.mxu0 0
        %1153 = vmatpush1.bf16.msra.mxu0 0
        %1154 = vmatprep.mubr.bf16.mxu0 0
        %1155 = vmatmul.mubr.bf16.gmra.mrb[0].mxu0 %v1050
        %v1156 = vpop.f32.mrb[0].mxu0
        %v1157 = vadd.f32 %v1072, %v1156
        %v1158 = vpop.f32.mrb[0].mxu0
        %v1159 = vpop.f32.mrb[0].mxu0
        %v1160 = vpop.f32.mrb[0].mxu0
        %1161 = vdwg.mxu0
        %v1162 = vmul.f32 %v1157, %v1157
        %1163 = vadd.xlane.f32.xlu0 %v1162
        %v1164 = vpop.xlane.xlu0 %1163
        %v1165 = vmax.f32 %v1164, 1e-24
        %v1166 = vrsqrt.pop %v1165
        %v1167 = vmul.f32 %v1157, %v1166
        %v1168 = vadd.f32 %v1167, 0.0
        %s1169 = scalar_lea.vmem %s526, 4 [#allocation6]
        %v1170 = vld [vmem:[%s1169] sm:$0xf]
        %1171 = vmatprep.subr.bf16.mxu0 0
        %1172 = vmatpush1.bf16.msra.mxu0 %v1106
        %1173 = vmatprep.subr.bf16.mxu0 0
        %1174 = vmatpush1.bf16.msra.mxu0 %v1107
        %1175 = vmatprep.subr.bf16.mxu0 0
        %1176 = vmatpush1.bf16.msra.mxu0 %v1108
        %1177 = vmatprep.subr.bf16.mxu0 0
        %1178 = vmatpush1.bf16.msra.mxu0 %v1109
        %1179 = vmatprep.subr.bf16.mxu0 0
        %1180 = vmatpush1.bf16.msra.mxu0 %v1110
        %1181 = vmatprep.subr.bf16.mxu0 0
        %1182 = vmatpush1.bf16.msra.mxu0 %v1111
        %1183 = vmatprep.subr.bf16.mxu0 0
        %1184 = vmatpush1.bf16.msra.mxu0 %v1112
        %1185 = vmatprep.subr.bf16.mxu0 0
        %1186 = vmatpush1.bf16.msra.mxu0 %v1113
        %1187 = vmatprep.subr.bf16.mxu0 0
        %1188 = vmatpush1.bf16.msra.mxu0 0
        %1189 = vmatprep.subr.bf16.mxu0 0
        %1190 = vmatpush1.bf16.msra.mxu0 0
        %1191 = vmatprep.subr.bf16.mxu0 0
        %1192 = vmatpush1.bf16.msra.mxu0 0
        %1193 = vmatprep.subr.bf16.mxu0 0
        %1194 = vmatpush1.bf16.msra.mxu0 0
        %1195 = vmatprep.subr.bf16.mxu0 0
        %1196 = vmatpush1.bf16.msra.mxu0 0
        %1197 = vmatprep.subr.bf16.mxu0 0
        %1198 = vmatpush1.bf16.msra.mxu0 0
        %1199 = vmatprep.subr.bf16.mxu0 0
        %1200 = vmatpush1.bf16.msra.mxu0 0
        %1201 = vmatprep.subr.bf16.mxu0 0
        %1202 = vmatpush1.bf16.msra.mxu0 0
        %1203 = vmatprep.mubr.bf16.mxu0 0
        %1204 = vmatmul.mubr.bf16.gmra.mrb[0].mxu0 %v1170
        %v1205 = vpop.f32.mrb[0].mxu0
        %v1206 = vadd.f32 %v1072, %v1205
        %v1207 = vpop.f32.mrb[0].mxu0
        %v1208 = vpop.f32.mrb[0].mxu0
        %v1209 = vpop.f32.mrb[0].mxu0
        %1210 = vdwg.mxu0
        %v1211 = vmul.f32 %v1206, %v1206
        %1212 = vadd.xlane.f32.xlu0 %v1211
        %v1213 = vpop.xlane.xlu0 %1212
        %v1214 = vmax.f32 %v1213, 1e-24
        %v1215 = vrsqrt.pop %v1214
        %v1216 = vmul.f32 %v1206, %v1215
        %v1217 = vadd.f32 %v1168, %v1216
        %s1218 = scalar_lea.vmem %s526, 8 [#allocation6]
        %v1219 = vld [vmem:[%s1218] sm:$0xf]
        %1220 = vmatprep.subr.bf16.mxu0 0
        %1221 = vmatpush1.bf16.msra.mxu0 %v1106
        %1222 = vmatprep.subr.bf16.mxu0 0
        %1223 = vmatpush1.bf16.msra.mxu0 %v1107
        %1224 = vmatprep.subr.bf16.mxu0 0
        %1225 = vmatpush1.bf16.msra.mxu0 %v1108
        %1226 = vmatprep.subr.bf16.mxu0 0
        %1227 = vmatpush1.bf16.msra.mxu0 %v1109
        %1228 = vmatprep.subr.bf16.mxu0 0
        %1229 = vmatpush1.bf16.msra.mxu0 %v1110
        %1230 = vmatprep.subr.bf16.mxu0 0
        %1231 = vmatpush1.bf16.msra.mxu0 %v1111
        %1232 = vmatprep.subr.bf16.mxu0 0
        %1233 = vmatpush1.bf16.msra.mxu0 %v1112
        %1234 = vmatprep.subr.bf16.mxu0 0
        %1235 = vmatpush1.bf16.msra.mxu0 %v1113
        %1236 = vmatprep.subr.bf16.mxu0 0
        %1237 = vmatpush1.bf16.msra.mxu0 0
        %1238 = vmatprep.subr.bf16.mxu0 0
        %1239 = vmatpush1.bf16.msra.mxu0 0
        %1240 = vmatprep.subr.bf16.mxu0 0
        %1241 = vmatpush1.bf16.msra.mxu0 0
        %1242 = vmatprep.subr.bf16.mxu0 0
        %1243 = vmatpush1.bf16.msra.mxu0 0
        %1244 = vmatprep.subr.bf16.mxu0 0
        %1245 = vmatpush1.bf16.msra.mxu0 0
        %1246 = vmatprep.subr.bf16.mxu0 0
        %1247 = vmatpush1.bf16.msra.mxu0 0
        %1248 = vmatprep.subr.bf16.mxu0 0
        %1249 = vmatpush1.bf16.msra.mxu0 0
        %1250 = vmatprep.subr.bf16.mxu0 0
        %1251 = vmatpush1.bf16.msra.mxu0 0
        %1252 = vmatprep.mubr.bf16.mxu0 0
        %1253 = vmatmul.mubr.bf16.gmra.mrb[0].mxu0 %v1219
        %v1254 = vpop.f32.mrb[0].mxu0
        %v1255 = vadd.f32 %v1072, %v1254
        %v1256 = vpop.f32.mrb[0].mxu0
        %v1257 = vpop.f32.mrb[0].mxu0
        %v1258 = vpop.f32.mrb[0].mxu0
        %1259 = vdwg.mxu0
        %v1260 = vmul.f32 %v1255, %v1255
        %1261 = vadd.xlane.f32.xlu0 %v1260
        %v1262 = vpop.xlane.xlu0 %1261
        %v1263 = vmax.f32 %v1262, 1e-24
        %v1264 = vrsqrt.pop %v1263
        %v1265 = vmul.f32 %v1255, %v1264
        %v1266 = vadd.f32 %v1217, %v1265
        %s1267 = scalar_lea.vmem %s526, 12 [#allocation6]
        %v1268 = vld [vmem:[%s1267] sm:$0xf]
        %1269 = vmatprep.subr.bf16.mxu0 0
        %1270 = vmatpush1.bf16.msra.mxu0 %v1106
        %1271 = vmatprep.subr.bf16.mxu0 0
        %1272 = vmatpush1.bf16.msra.mxu0 %v1107
        %1273 = vmatprep.subr.bf16.mxu0 0
        %1274 = vmatpush1.bf16.msra.mxu0 %v1108
        %1275 = vmatprep.subr.bf16.mxu0 0
        %1276 = vmatpush1.bf16.msra.mxu0 %v1109
        %1277 = vmatprep.subr.bf16.mxu0 0
        %1278 = vmatpush1.bf16.msra.mxu0 %v1110
        %1279 = vmatprep.subr.bf16.mxu0 0
        %1280 = vmatpush1.bf16.msra.mxu0 %v1111
        %1281 = vmatprep.subr.bf16.mxu0 0
        %1282 = vmatpush1.bf16.msra.mxu0 %v1112
        %1283 = vmatprep.subr.bf16.mxu0 0
        %1284 = vmatpush1.bf16.msra.mxu0 %v1113
        %1285 = vmatprep.subr.bf16.mxu0 0
        %1286 = vmatpush1.bf16.msra.mxu0 0
        %1287 = vmatprep.subr.bf16.mxu0 0
        %1288 = vmatpush1.bf16.msra.mxu0 0
        %1289 = vmatprep.subr.bf16.mxu0 0
        %1290 = vmatpush1.bf16.msra.mxu0 0
        %1291 = vmatprep.subr.bf16.mxu0 0
        %1292 = vmatpush1.bf16.msra.mxu0 0
        %1293 = vmatprep.subr.bf16.mxu0 0
        %1294 = vmatpush1.bf16.msra.mxu0 0
        %1295 = vmatprep.subr.bf16.mxu0 0
        %1296 = vmatpush1.bf16.msra.mxu0 0
        %1297 = vmatprep.subr.bf16.mxu0 0
        %1298 = vmatpush1.bf16.msra.mxu0 0
        %1299 = vmatprep.subr.bf16.mxu0 0
        %1300 = vmatpush1.bf16.msra.mxu0 0
        %1301 = vmatprep.mubr.bf16.mxu0 0
        %1302 = vmatmul.mubr.bf16.gmra.mrb[0].mxu0 %v1268
        %v1303 = vpop.f32.mrb[0].mxu0
        %v1304 = vadd.f32 %v1072, %v1303
        %v1305 = vpop.f32.mrb[0].mxu0
        %v1306 = vpop.f32.mrb[0].mxu0
        %v1307 = vpop.f32.mrb[0].mxu0
        %1308 = vdwg.mxu0
        %v1309 = vmul.f32 %v1304, %v1304
        %1310 = vadd.xlane.f32.xlu0 %v1309
        %v1311 = vpop.xlane.xlu0 %1310
        %v1312 = vmax.f32 %v1311, 1e-24
        %v1313 = vrsqrt.pop %v1312
        %v1314 = vmul.f32 %v1304, %v1313
        %v1315 = vadd.f32 %v1266, %v1314
        %v1316 = vmul.f32 %v1315, 0.25
        %v1317 = vpack.c.bf16 %v1316, %v1316
        %v1318 = vld [vmem:[#allocation2] sm:$0xff]
        %v1319 = vld [vmem:[#allocation2 + $0x8] sm:$0xff]
        %v1320 = vld [vmem:[#allocation2 + $0x10] sm:$0xff]
        %v1321 = vld [vmem:[#allocation2 + $0x18] sm:$0xff]
        %v1322 = vld [vmem:[#allocation2 + $0x20] sm:$0xff]
        %v1323 = vld [vmem:[#allocation2 + $0x28] sm:$0xff]
        %v1324 = vld [vmem:[#allocation2 + $0x30] sm:$0xff]
        %v1325 = vld [vmem:[#allocation2 + $0x38] sm:$0xff]
        %1326 = vmatprep.subr.bf16.mxu0 0
        %1327 = vmatpush1.bf16.msra.mxu0 %v1318
        %1328 = vmatprep.subr.bf16.mxu0 0
        %1329 = vmatpush1.bf16.msra.mxu0 %v1319
        %1330 = vmatprep.subr.bf16.mxu0 0
        %1331 = vmatpush1.bf16.msra.mxu0 %v1320
        %1332 = vmatprep.subr.bf16.mxu0 0
        %1333 = vmatpush1.bf16.msra.mxu0 %v1321
        %1334 = vmatprep.subr.bf16.mxu0 0
        %1335 = vmatpush1.bf16.msra.mxu0 %v1322
        %1336 = vmatprep.subr.bf16.mxu0 0
        %1337 = vmatpush1.bf16.msra.mxu0 %v1323
        %1338 = vmatprep.subr.bf16.mxu0 0
        %1339 = vmatpush1.bf16.msra.mxu0 %v1324
        %1340 = vmatprep.subr.bf16.mxu0 0
        %1341 = vmatpush1.bf16.msra.mxu0 %v1325
        %1342 = vmatprep.subr.bf16.mxu0 0
        %1343 = vmatpush1.bf16.msra.mxu0 0
        %1344 = vmatprep.subr.bf16.mxu0 0
        %1345 = vmatpush1.bf16.msra.mxu0 0
        %1346 = vmatprep.subr.bf16.mxu0 0
        %1347 = vmatpush1.bf16.msra.mxu0 0
        %1348 = vmatprep.subr.bf16.mxu0 0
        %1349 = vmatpush1.bf16.msra.mxu0 0
        %1350 = vmatprep.subr.bf16.mxu0 0
        %1351 = vmatpush1.bf16.msra.mxu0 0
        %1352 = vmatprep.subr.bf16.mxu0 0
        %1353 = vmatpush1.bf16.msra.mxu0 0
        %1354 = vmatprep.subr.bf16.mxu0 0
        %1355 = vmatpush1.bf16.msra.mxu0 0
        %1356 = vmatprep.subr.bf16.mxu0 0
        %1357 = vmatpush1.bf16.msra.mxu0 0
        %1358 = vmatprep.mubr.bf16.mxu0 0
        %1359 = vmatmul.mubr.bf16.gmra.mrb[0].mxu0 %v1317
        %v1360 = vpop.f32.mrb[0].mxu0
        %v1361 = vadd.f32 0.0, %v1360
        %v1362 = vpop.f32.mrb[0].mxu0
        %v1363 = vpop.f32.mrb[0].mxu0
        %v1364 = vpop.f32.mrb[0].mxu0
        %1365 = vdwg.mxu0
        %v1366 = vld [vmem:[%s596] sm:$0xff]
        %v1367 = vld [vmem:[%s2] sm:$0x1]
        %1368 = vset.pattern.permute.xlu0 0
        %1369 = vperm.xlu0 %1368, %v1366
        %v1370 = vpop.permute.xlu0 %1369
        %v1371 = vlaneseq
        %v1372 = vshrl.u32 %v1371, 7
        %v1373 = vsub.s32 0, %v1372
        %v1374 = vrot.slane %v1367, %v1373
        %vm1375 = vcmp.eq.s32.totalorder %v1370, %v1374
        %v1376 = vsel %vm1375, 1, 0
        %v1377 = vcvt.s32.f32 %v1376
        %vm1378 = vcmask 261120
        %v1379 = vsel %vm1378, %v1377, 0.0
        %1380 = vadd.xlane.f32.xlu0 %v1379
        %v1381 = vpop.xlane.xlu0 %1380
        %v1382 = vrcp.pop %v1381
        %v1383 = vsel %vm1378, %v1361, -inf
        %1384 = vmax.xlane.f32.xlu0 %v1383
        %v1385 = vpop.xlane.xlu0 %1384
        %v1386 = vsub.f32 %v1361, %v1385
        %v1387 = vmul.f32 %v1386, 1.442695
        %v1388 = vpow.pop %v1387
        %v1389 = vsel %vm1378, %v1388, 0.0
        %1390 = vadd.xlane.f32.xlu0 %v1389
        %v1391 = vpop.xlane.xlu0 %1390
        %v1392 = vlog2.pop %v1391
        %v1393 = vmul.f32 %v1392, 0.6931472
        %v1394 = vadd.f32 %v1385, %v1393
        %v1395 = vld [vmem:[%s603] sm:$0x1]
        %v1396 = vrot.slane %v1394, 4
        %v1397 = vadd.f32 %v1394, %v1396
        %v1398 = vrot.slane %v1397, 2
        %v1399 = vadd.f32 %v1397, %v1398
        %v1400 = vrot.slane %v1399, 1
        %v1401 = vadd.f32 %v1399, %v1400
        %v1402 = vadd.f32 %v1395, %v1401
        %vm1403 = vcmask 0
        %1404 = vst.msk [vmem:[%s603] sm:$0x1] %vm1403, %v1402
        %v1405 = vld [vmem:[%s606] sm:$0x1]
        %v1406 = vmul.f32 %v1377, %v1361
        %v1407 = vsel %vm1378, %v1406, 0.0
        %1408 = vadd.xlane.f32.xlu0 %v1407
        %v1409 = vpop.xlane.xlu0 %1408
        %v1410 = vmul.f32 %v1409, %v1382
        %v1411 = vrot.slane %v1410, 4
        %v1412 = vadd.f32 %v1410, %v1411
        %v1413 = vrot.slane %v1412, 2
        %v1414 = vadd.f32 %v1412, %v1413
        %v1415 = vrot.slane %v1414, 1
        %v1416 = vadd.f32 %v1414, %v1415
        %v1417 = vadd.f32 %v1405, %v1416
        %1418 = vst.msk [vmem:[%s606] sm:$0x1] %vm1403, %v1417
        %vm1419 = vcmp.ge.f32.partialorder %v1361, %v1385
        %v1420 = vld [vmem:[#allocation3] sm:$0x1]
        %v1421 = vlaneseq
        %v1422 = vshrl.u32 %v1421, 7
        %v1423 = vsub.s32 0, %v1422
        %v1424 = vrot.slane %v1420, %v1423
        %v1425 = vsel %vm1419, %v1424, 32
        %v1426 = vsel %vm1378, %v1425, 2147483647
        %v1427 = vand.u32 %v1426, 65535
        %v1428 = vshra.s32 %v1426, 16
        %v1429 = vcvt.s32.f32 %v1427
        %v1430 = vcvt.s32.f32 %v1428
        %1431 = vmin.xlane.f32.xlu0 %v1430
        %v1432 = vpop.xlane.xlu0 %1431
        %vm1433 = vcmp.eq.f32.partialorder %v1430, %v1432
        %v1434 = vsel %vm1433, %v1429, inf
        %1435 = vmin.xlane.f32.xlu0 %v1434
        %v1436 = vpop.xlane.xlu0 %1435
        %v1437 = vcvt.f32.s32 %v1436
        %v1438 = vcvt.f32.s32 %v1432
        %v1439 = vshll.u32 %v1438, 16
        %v1440 = vadd.s32 %v1439, %v1437
        %v1441 = vld [vmem:[#allocation4] sm:$0xff]
        %v1442 = vstv %s1049
        %v1443 = vadd.s32 %v1442, %v1441
        %v1444 = vld [vmem:[%s609] sm:$0x1]
        %vm1445 = vcmp.eq.s32.totalorder %v1440, %v1443
        %v1446 = vsel %vm1445, 1, 0
        %v1447 = vcvt.s32.f32 %v1446
        %vm1448 = vcmask 7168
        %v1449 = vsel %vm1448, %v1447, 0.0
        %v1450 = vrot.slane %v1449, 4
        %v1451 = vadd.f32 %v1449, %v1450
        %v1452 = vrot.slane %v1451, 2
        %v1453 = vadd.f32 %v1451, %v1452
        %v1454 = vrot.slane %v1453, 1
        %v1455 = vadd.f32 %v1453, %v1454
        %v1456 = vadd.f32 %v1444, %v1455
        %1457 = vst.msk [vmem:[%s609] sm:$0x1] %vm1403, %v1456
        %v1458 = vrot.slane %v1383, 4
        %v1459 = vmax.f32 %v1383, %v1458
        %v1460 = vrot.slane %v1459, 2
        %v1461 = vmax.f32 %v1459, %v1460
        %v1462 = vrot.slane %v1461, 1
        %v1463 = vmax.f32 %v1461, %v1462
        %v1464 = vld [vmem:[%s563] sm:$0x1]
        %v1465 = vmax.f32 %v1464, %v1463
        %v1466 = vmul.f32 %v1385, 1.442695
        %v1467 = vpow.pop %v1466
        %v1468 = vmul.f32 %v1388, %v1467
        %v1469 = vsel %vm1378, %v1468, 0.0
        %v1470 = vrot.slane %v1469, 4
        %v1471 = vadd.f32 %v1469, %v1470
        %v1472 = vrot.slane %v1471, 2
        %v1473 = vadd.f32 %v1471, %v1472
        %v1474 = vrot.slane %v1473, 1
        %v1475 = vadd.f32 %v1473, %v1474
        %v1476 = vld [vmem:[%s569] sm:$0x1]
        %v1477 = vsub.f32 %v1464, %v1465
        %v1478 = vmul.f32 %v1477, 1.442695
        %v1479 = vpow.pop %v1478
        %v1480 = vmul.f32 %v1476, %v1479
        %v1481 = vsub.f32 0.0, %v1465
        %v1482 = vmul.f32 %v1481, 1.442695
        %v1483 = vpow.pop %v1482
        %v1484 = vmul.f32 %v1475, %v1483
        %v1485 = vadd.f32 %v1480, %v1484
        %vm1486 = vcmask 253952
        %1487 = vst.msk [vmem:[%s569] sm:$0x1] %vm1486, %v1485
        %vm1488 = vcmp.ge.f32.partialorder %v1361, %v1463
        %v1489 = vld [vmem:[#allocation4] sm:$0xff]
        %1490 = vset.pattern.permute.xlu0 0
        %1491 = vperm.xlu0 %1490, %v1489
        %v1492 = vpop.permute.xlu0 %1491
        %v1493 = vsel %vm1488, %v1492, 8
        %v1494 = vsel %vm1378, %v1493, 2147483647
        %v1495 = vrot.slane %v1494, 4
        %vm1496 = vcmp.lt.s32.totalorder %v1494, %v1495
        %v1497 = vsel %vm1496, %v1494, %v1495
        %v1498 = vrot.slane %v1497, 2
        %vm1499 = vcmp.lt.s32.totalorder %v1497, %v1498
        %v1500 = vsel %vm1499, %v1497, %v1498
        %v1501 = vrot.slane %v1500, 1
        %vm1502 = vcmp.lt.s32.totalorder %v1500, %v1501
        %v1503 = vsel %vm1502, %v1500, %v1501
        %v1504 = vadd.s32 %v1442, %v1503
        %vm1505 = vcmp.gt.f32.partialorder %v1463, %v1464
        %v1506 = vld [vmem:[%s575] sm:$0x1]
        %v1507 = vsel %vm1505, %v1504, %v1506
        %1508 = vst.msk [vmem:[%s575] sm:$0x1] %vm1486, %v1507
        %1509 = vst.msk [vmem:[%s563] sm:$0x1] %vm1486, %v1465
        %s1510 = sand.u32 %s260, 1
        %s1511 = scalar_lea.sflag [#allocation8], %s1510
        %s1512 = sand.u32 %s260, 1
        %s1513 = scalar_lea.vmem [#allocation7], %s1512
        %s1514 = sand.u32 %s33, 1
        %s1515 = scalar_lea.sflag [#allocation10], %s1514
        %s1516 = sand.u32 %s286, 1
        %s1517 = scalar_lea.vmem [#allocation9], %s1516
        %s1518 = sand.u32 %s33, 1
        %s1519 = scalar_lea.sflag [#allocation10], %s1518
        %s1520 = sand.u32 %s312, 1
        %s1521 = scalar_lea.vmem [#allocation11], %s1520
        %p1522 = scmp.lt.s32.totalorder %s37, 1
        %s1523 = scalar_select %p1522, %s37, 1
        %s1524 = scalar_lea.vmem %s12, %s1523
        %p1525 = scmp.lt.s32.totalorder %s37, 1
        %s1526 = scalar_select %p1525, %s37, 1
        %s1527 = scalar_lea.vmem %s13, %s1526
        %p1528 = scmp.lt.s32.totalorder %s37, 1
        %s1529 = scalar_select %p1528, %s37, 1
        %s1530 = scalar_lea.vmem %s14, %s1529
        // Predicated region
        $region102: #{tpu_custom_call.1} parent=92 // pred_check
          %p1531 = pneg %p270
        $region103: #{tpu_custom_call.1} parent=92 // pred_check_branch
          %1533 = sbr.rel (%p1531) target = $region105
        $region104: #{tpu_custom_call.1} parent=92 // pred_region
          %s1535 = ssub.s32 16, 16
          %1536 = vsyncadd %s1511, %s1535
          %s1537 = smul.addr %s37, 16
          %s1538 = scalar_lea.hbm %s9, %s1537
          %s1540 = sshll.u32 %s1513, 4
          %s1541 = int_to_ptr.vmem [resolvable:$true] %s1540
          %1543 = dma.vmem_to_hbm [thread:$0]  %s1541, 16, %s1538, %s1511
        $region105: #{tpu_custom_call.1} parent=92 // pred_fallthru
          _
        // Predicated region
        $region106: #{tpu_custom_call.1} parent=92 // pred_check
          %p1544 = pneg %p296
        $region107: #{tpu_custom_call.1} parent=92 // pred_check_branch
          %1546 = sbr.rel (%p1544) target = $region109
        $region108: #{tpu_custom_call.1} parent=92 // pred_region
          %s1548 = ssub.s32 16, 16
          %1549 = vsyncadd %s1515, %s1548
          %s1550 = smul.addr %s37, 16
          %s1551 = scalar_lea.hbm %s10, %s1550
          %s1553 = sshll.u32 %s1517, 4
          %s1554 = int_to_ptr.vmem [resolvable:$true] %s1553
          %1556 = dma.vmem_to_hbm [thread:$0]  %s1554, 16, %s1551, %s1515
        $region109: #{tpu_custom_call.1} parent=92 // pred_fallthru
          _
        // Predicated region
        $region110: #{tpu_custom_call.1} parent=92 // pred_check
          %p1557 = pneg %p322
        $region111: #{tpu_custom_call.1} parent=92 // pred_check_branch
          %1559 = sbr.rel (%p1557) target = $region113
        $region112: #{tpu_custom_call.1} parent=92 // pred_region
          %s1561 = ssub.s32 16, 16
          %1562 = vsyncadd %s1519, %s1561
          %s1563 = smul.addr %s37, 16
          %s1564 = scalar_lea.hbm %s11, %s1563
          %s1566 = sshll.u32 %s1521, 4
          %s1567 = int_to_ptr.vmem [resolvable:$true] %s1566
          %1569 = dma.vmem_to_hbm [thread:$0]  %s1567, 16, %s1564, %s1519
        $region113: #{tpu_custom_call.1} parent=92 // pred_fallthru
          _
        // Predicated region
        $region114: #{tpu_custom_call.1} parent=92 // pred_check
          %p1570 = pneg %p348
        $region115: #{tpu_custom_call.1} parent=92 // pred_check_branch
          %1572 = sbr.rel (%p1570) target = $region117
        $region116: #{tpu_custom_call.1} parent=92 // pred_region
          _
        $region117: #{tpu_custom_call.1} parent=92 // pred_fallthru
          _
        // Predicated region
        $region118: #{tpu_custom_call.1} parent=92 // pred_check
          %p1573 = pneg %p374
        $region119: #{tpu_custom_call.1} parent=92 // pred_check_branch
          %1575 = sbr.rel (%p1573) target = $region121
        $region120: #{tpu_custom_call.1} parent=92 // pred_region
          _
        $region121: #{tpu_custom_call.1} parent=92 // pred_fallthru
          _
        // Predicated region
        $region122: #{tpu_custom_call.1} parent=92 // pred_check
          %p1576 = pneg %p400
        $region123: #{tpu_custom_call.1} parent=92 // pred_check_branch
          %1578 = sbr.rel (%p1576) target = $region125
        $region124: #{tpu_custom_call.1} parent=92 // pred_region
          _
        $region125: #{tpu_custom_call.1} parent=92 // pred_fallthru
          _
      $region93: #{tpu_custom_call.1} parent=5 // pred_fallthru
        _
      %p1579 = scmp.le.s32.totalorder 2, %s28
      // Predicated region
      $region126: #{tpu_custom_call.1} parent=5 // pred_check
        %p1580 = pneg %p1579
      $region127: #{tpu_custom_call.1} parent=5 // pred_check_branch
        %1582 = sbr.rel (%p1580) target = $region129
      $region128: #{tpu_custom_call.1} parent=5 // pred_region
        %s1583 = ssub.s32 %s28, 2
        // Predicated region
        $region130: #{tpu_custom_call.1} parent=128 // pred_check
          %p1584 = pneg %p276
        $region131: #{tpu_custom_call.1} parent=128 // pred_check_branch
          %1586 = sbr.rel (%p1584) target = $region133
        $region132: #{tpu_custom_call.1} parent=128 // pred_region
          %s1587 = sand.u32 %s261, 1
          %s1588 = scalar_lea.sflag [#allocation8], %s1587
          %s1589 = sand.u32 %s261, 1
          %s1590 = scalar_lea.vmem [#allocation7], %s1589
          %1591 = dma.done %s1588, 16
        $region133: #{tpu_custom_call.1} parent=128 // pred_fallthru
          _
        // Predicated region
        $region134: #{tpu_custom_call.1} parent=128 // pred_check
          %p1592 = pneg %p302
        $region135: #{tpu_custom_call.1} parent=128 // pred_check_branch
          %1594 = sbr.rel (%p1592) target = $region137
        $region136: #{tpu_custom_call.1} parent=128 // pred_region
          %s1595 = sand.u32 %s34, 1
          %s1596 = scalar_lea.sflag [#allocation10], %s1595
          %s1597 = sand.u32 %s287, 1
          %s1598 = scalar_lea.vmem [#allocation9], %s1597
          %1599 = dma.done %s1596, 16
        $region137: #{tpu_custom_call.1} parent=128 // pred_fallthru
          _
        // Predicated region
        $region138: #{tpu_custom_call.1} parent=128 // pred_check
          %p1600 = pneg %p328
        $region139: #{tpu_custom_call.1} parent=128 // pred_check_branch
          %1602 = sbr.rel (%p1600) target = $region141
        $region140: #{tpu_custom_call.1} parent=128 // pred_region
          %s1603 = sand.u32 %s34, 1
          %s1604 = scalar_lea.sflag [#allocation10], %s1603
          %s1605 = sand.u32 %s313, 1
          %s1606 = scalar_lea.vmem [#allocation11], %s1605
          %1607 = dma.done %s1604, 16
        $region141: #{tpu_custom_call.1} parent=128 // pred_fallthru
          _
        // Predicated region
        $region142: #{tpu_custom_call.1} parent=128 // pred_check
          %p1608 = pneg %p354
        $region143: #{tpu_custom_call.1} parent=128 // pred_check_branch
          %1610 = sbr.rel (%p1608) target = $region145
        $region144: #{tpu_custom_call.1} parent=128 // pred_region
          %p1611 = scmp.lt.s32.totalorder %s39, 1
          %s1612 = scalar_select %p1611, %s39, 1
          %s1613 = scalar_lea.vmem %s12, %s1612
        $region145: #{tpu_custom_call.1} parent=128 // pred_fallthru
          _
        // Predicated region
        $region146: #{tpu_custom_call.1} parent=128 // pred_check
          %p1614 = pneg %p380
        $region147: #{tpu_custom_call.1} parent=128 // pred_check_branch
          %1616 = sbr.rel (%p1614) target = $region149
        $region148: #{tpu_custom_call.1} parent=128 // pred_region
          %p1617 = scmp.lt.s32.totalorder %s39, 1
          %s1618 = scalar_select %p1617, %s39, 1
          %s1619 = scalar_lea.vmem %s13, %s1618
        $region149: #{tpu_custom_call.1} parent=128 // pred_fallthru
          _
        // Predicated region
        $region150: #{tpu_custom_call.1} parent=128 // pred_check
          %p1620 = pneg %p406
        $region151: #{tpu_custom_call.1} parent=128 // pred_check_branch
          %1622 = sbr.rel (%p1620) target = $region153
        $region152: #{tpu_custom_call.1} parent=128 // pred_region
          %p1623 = scmp.lt.s32.totalorder %s39, 1
          %s1624 = scalar_select %p1623, %s39, 1
          %s1625 = scalar_lea.vmem %s14, %s1624
        $region153: #{tpu_custom_call.1} parent=128 // pred_fallthru
          _
      $region129: #{tpu_custom_call.1} parent=5 // pred_fallthru
        _
    $region6: #{tpu_custom_call.1} parent=1 // loop_footer
      %s32 = sadd.s32 1, %s28
    $region7: #{tpu_custom_call.1} parent=1 // loop_footer_branch
      %27 = sbr.rel target = $region3
    $region8: #{tpu_custom_call.1} parent=1 // loop_exit
      _
    %1626 = vsyncpa [#allocation8], 1
    %s1627 = scalar_lea.sflag [#allocation8], 1
    %1628 = vsyncpa %s1627, 1
    %1629 = vsyncpa [#allocation10], 1
    %s1630 = scalar_lea.sflag [#allocation10], 1
    %1631 = vsyncpa %s1630, 1

</llo_original>
